<compile_context>
chip_gen: v7x
topology: tpu7x:2x2x1
jax: 0.10.0
libtpu: 0.0.40
codegen_flags: <defaults>
</compile_context>

<pallas_src>
import functools

import jax
import jax.numpy as jnp
from jax.experimental import pallas as pl
from jax.experimental.pallas import tpu as pltpu


def _gdna_kernel(attn_ref, out_ref, *, group_size: int):
    """One block = (BHb, N, Mb): BHb independent maps, full N, whole groups."""
    x = attn_ref[...].astype(jnp.float32)                 # single upcast on load

    # --- numerically stable softmax over the N axis (axis 1 of the block) ---
    m = jnp.max(x, axis=1, keepdims=True)                  # (BHb, 1, Mb)
    e = jnp.exp(x - m)                                      # EUP
    denom = jnp.sum(e, axis=1, keepdims=True)               # (BHb, 1, Mb)
    # reciprocal of the *reduced* array (EUP slot), then broadcast multiply.
    sm = e * pl.reciprocal(denom, approx=True)              # (BHb, N, Mb)

    bhb, n, mb = x.shape
    ng = mb // group_size                                    # whole groups/block

    if ng == 1:
        # One group per block: plain lane-axis sum, single full-block store.
        s = jnp.sum(sm, axis=2, keepdims=True) + 1e-8        # (BHb, N, 1)
        out_ref[...] = (sm * pl.reciprocal(s, approx=True)).astype(out_ref.dtype)
    elif group_size % 128 == 0:
        # 128-aligned groups: static lane slices (no relayout, no masks), one
        # lane-dense store per group.
        for g in range(ng):
            lo = g * group_size
            seg = sm[:, :, lo:lo + group_size]
            s = jnp.sum(seg, axis=2, keepdims=True) + 1e-8   # (BHb, N, 1)
            out_ref[:, :, lo:lo + group_size] = (
                seg * pl.reciprocal(s, approx=True)).astype(out_ref.dtype)
    else:
        # General case: offload the segment-sum and the broadcast-back to the
        # otherwise-idle MXU via a constant 0/1 group-membership matrix.
        # (No per-group VALU passes, no inv-accumulator traffic.)
        lane = jax.lax.broadcasted_iota(jnp.int32, (mb, ng), 0)
        grp = jax.lax.broadcasted_iota(jnp.int32, (mb, ng), 1)
        gmat = ((lane >= grp * group_size) &
                (lane < (grp + 1) * group_size)).astype(jnp.float32)   # (Mb, ng)
        lane_t = jax.lax.broadcasted_iota(jnp.int32, (ng, mb), 1)
        grp_t = jax.lax.broadcasted_iota(jnp.int32, (ng, mb), 0)
        gmat_t = ((lane_t >= grp_t * group_size) &
                  (lane_t < (grp_t + 1) * group_size)).astype(jnp.float32)  # (ng, Mb)

        sm2 = sm.reshape(bhb * n, mb)
        gsum = jnp.dot(sm2, gmat, preferred_element_type=jnp.float32,
                       precision=jax.lax.Precision.HIGHEST)    # (BHb*N, ng)
        inv = pl.reciprocal(gsum + 1e-8, approx=True)           # EUP
        scale = jnp.dot(inv, gmat_t, preferred_element_type=jnp.float32,
                        precision=jax.lax.Precision.HIGHEST)    # (BHb*N, Mb)
        # Single lane-dense full-block store.
        out_ref[...] = (sm2 * scale).reshape(bhb, n, mb).astype(out_ref.dtype)


def _vmem_budget_and_limit():
    """Generation-aware sizing (v5e/v6e: 128 MiB VMEM, v7x: 64 MiB)."""
    try:
        cap = int(pltpu.get_tpu_info().vmem_capacity_bytes)
    except Exception:
        cap = 64 * 1024 * 1024           # conservative (v7x-sized) fallback
    # Per-step resident set (double-buffered in+out blocks + ~3 f32 temps)
    # capped at ~16 MiB -- comfortably under a cap//2 scoped limit even on v7x
    # -- and never more than a quarter of physical VMEM.
    budget = min(16 * 1024 * 1024, cap // 4)
    limit = cap // 2
    return budget, limit


def _choose_tiles(bh, n, m, group_size, itemsize, budget):
    """Pick (BHb, Mb): maps per grid step and lane-block width."""

    def per_map_bytes(mb):
        # double-buffered in + out blocks plus ~3 live f32 full-block temps.
        return n * mb * (4 * itemsize + 3 * 4)

    # Mb candidates: divisors of M made of whole groups.  group_size itself is
    # always a candidate, so there is no "no legal split" overflow fallback.
    cands = [d for d in range(group_size, m + 1, group_size) if m % d == 0]
    lane_dense = [d for d in cands if d % 128 == 0]
    fits = [d for d in cands if per_map_bytes(d) <= budget]
    fits_ld = [d for d in fits if d % 128 == 0]
    if fits_ld:
        mb = max(fits_ld)            # biggest lane-dense block that fits
    elif fits:
        mb = max(fits)
    elif lane_dense:
        mb = min(lane_dense)
    else:
        mb = min(cands)              # = group_size: graceful minimum retile
    # TODO(synk): if M is not a multiple of 128 every store is a masked
    # vst.msk; a lane-dense relayout would need an extra HBM round trip in the
    # wrapper, which does not pay off for this memory-bound op.

    m_steps = m // mb

    # Maps per grid step under the VMEM budget (at least one).
    bhb = max(1, min(bh, budget // per_map_bytes(mb)))

    # Keep >= ~8 total grid steps (pipeline overlap + both v7x TensorCores),
    # but never shrink a block below ~1 MiB to get there.
    target_steps = 8
    if m_steps * pl.cdiv(bh, bhb) < target_steps:
        bh_steps_wanted = pl.cdiv(target_steps, m_steps)
        bhb_for_steps = max(1, bh // bh_steps_wanted)
        bhb_floor = max(1, pl.cdiv(1 << 20, per_map_bytes(mb)))
        bhb = min(bhb, max(bhb_for_steps, bhb_floor))
    return bhb, mb


def grouped_double_normalization_attention(attn: jax.Array,
                                           num_groups: int,
                                           *,
                                           block_bh: int | None = None,
                                           block_m: int | None = None) -> jax.Array:
    """attn: (B, H, N, M) float array. Returns same shape/dtype."""
    B, H, N, M = attn.shape
    if M % num_groups != 0:
        # TODO(synk): torch.chunk tolerates an uneven last group; this kernel
        # assumes M divisible by num_groups (the common grouped-attention case).
        raise ValueError("M must be divisible by num_groups for this kernel")
    group_size = M // num_groups

    BH = B * H
    x = attn.reshape(BH, N, M)            # merges leading dims only (free)

    vmem_budget, vmem_limit = _vmem_budget_and_limit()
    BHb, Mb = _choose_tiles(BH, N, M, group_size, attn.dtype.itemsize,
                            vmem_budget)
    if block_bh is not None:              # manual override (tests / tuning)
        BHb = max(1, min(block_bh, BH))
    if block_m is not None:
        if block_m % group_size or M % block_m:
            raise ValueError("block_m must be a whole-group divisor of M")
        Mb = block_m

    kernel = functools.partial(_gdna_kernel, group_size=group_size)
    out = pl.pallas_call(
        kernel,
        out_shape=jax.ShapeDtypeStruct((BH, N, M), attn.dtype),
        grid_spec=pltpu.PrefetchScalarGridSpec(
            num_scalar_prefetch=0,
            # Ragged BH axis is fine: maps are independent and padded maps are
            # discarded on store (no degenerate BHb=1 fallback needed).
            grid=(pl.cdiv(BH, BHb), M // Mb),
            in_specs=[pl.BlockSpec((BHb, N, Mb), lambda i, j: (i, 0, j))],
            out_specs=pl.BlockSpec((BHb, N, Mb), lambda i, j: (i, 0, j)),
        ),
        compiler_params=pltpu.CompilerParams(
            dimension_semantics=("parallel", "parallel"),
            vmem_limit_bytes=int(vmem_limit),
        ),
    )(x)
    return out.reshape(B, H, N, M)


def _reference(attn: jax.Array, num_groups: int) -> jax.Array:
    # Pure-JAX reference mirroring the PyTorch forward.
    sm = jax.nn.softmax(attn.astype(jnp.float32), axis=2)
    M = attn.shape[-1]
    gs = M // num_groups
    groups = [sm[..., g * gs:(g + 1) * gs] for g in range(num_groups)]
    normed = [g / (jnp.sum(jnp.abs(g), axis=3, keepdims=True) + 1e-8)
              for g in groups]
    return jnp.concatenate(normed, axis=3).astype(attn.dtype)


if __name__ == "__main__":
    key = jax.random.PRNGKey(0)
    # Small shapes consistent with the module: attn is (B, heads, N, M).
    cases = [
        # (B, H, N, M, num_groups, block_bh): exercise every code path.
        (2, 4, 16, 128, 4, None),   # MXU segment-sum path, lane-dense output
        (2, 2, 16, 256, 2, None),   # 128-aligned groups -> static-slice path
        (2, 3, 16, 128, 1, 4),      # single group + ragged BH grid (6 maps, BHb=4)
        (2, 4, 16, 16, 4, None),    # original tiny demo shape (masked stores)
    ]
    for idx, (B, heads, N, M, num_groups, bbh) in enumerate(cases):
        k = jax.random.fold_in(key, idx)
        attn = jax.random.normal(k, (B, heads, N, M), dtype=jnp.float32)

        out = jax.block_until_ready(
            grouped_double_normalization_attention(attn, num_groups,
                                                   block_bh=bbh))
        ref = _reference(attn, num_groups)

        assert out.shape == (B, heads, N, M)
        assert out.dtype == attn.dtype
        err = float(jnp.max(jnp.abs(out - ref)))
        # approx EUP reciprocals (softmax + group norm) trade ~1e-4..1e-3
        # relative error for a free EUP slot.
        assert jnp.allclose(out, ref, atol=5e-4, rtol=1e-2), (
            f"case {idx}: max abs err {err}")

    print("KERNEL_OK")
</pallas_src>

<mosaic_0001>
module attributes {stable_mosaic.version = 11 : i64} {
  func.func @_gdna_kernel(%arg0: i32, %arg1: i32, %arg2: memref<8x16x128xf32, #tpu.memory_space<vmem>>, %arg3: memref<8x16x128xf32, #tpu.memory_space<vmem>>) attributes {dimension_semantics = [#tpu.dimension_semantics<parallel>, #tpu.dimension_semantics<parallel>], iteration_bounds = array<i64: 1, 1>, scalar_prefetch = 0 : i64, scratch_operands = 0 : i64, tpu.core_type = #tpu.core_type<tc>, window_params = [{transform_indices = @transform_0, window_bounds = array<i64: 8, 16, 128>}, {transform_indices = @transform_1, window_bounds = array<i64: 8, 16, 128>}]} {
    %c0 = arith.constant 0 : index
    %c0_0 = arith.constant 0 : index
    %c0_1 = arith.constant 0 : index
    %0 = vector.load %arg2[%c0, %c0_0, %c0_1] : memref<8x16x128xf32, #tpu.memory_space<vmem>>, vector<8x16x128xf32>
    %cst = arith.constant dense<0xFF800000> : vector<8x128xf32>
    %1 = vector.multi_reduction <maximumf>, %0, %cst [1] : vector<8x16x128xf32> to vector<8x128xf32>
    %2 = vector.shape_cast %1 : vector<8x128xf32> to vector<8x1x128xf32>
    %3 = vector.broadcast %2 : vector<8x1x128xf32> to vector<8x16x128xf32>
    %4 = arith.subf %0, %3 : vector<8x16x128xf32>
    %5 = math.exp %4 : vector<8x16x128xf32>
    %cst_2 = arith.constant dense<0.000000e+00> : vector<8x128xf32>
    %6 = vector.multi_reduction <add>, %5, %cst_2 [1] : vector<8x16x128xf32> to vector<8x128xf32>
    %7 = vector.shape_cast %6 : vector<8x128xf32> to vector<8x1x128xf32>
    %8 = tpu.reciprocal %7 {approx = true} : vector<8x1x128xf32> -> vector<8x1x128xf32>
    %9 = vector.broadcast %8 : vector<8x1x128xf32> to vector<8x16x128xf32>
    %10 = arith.mulf %5, %9 : vector<8x16x128xf32>
    %11 = tpu.iota {dimensions = array<i32: 0>} : vector<128x4xi32>
    %12 = tpu.iota {dimensions = array<i32: 1>} : vector<128x4xi32>
    %c32_i32 = arith.constant 32 : i32
    %13 = vector.broadcast %c32_i32 : i32 to vector<128x4xi32>
    %14 = arith.muli %12, %13 : vector<128x4xi32>
    %15 = arith.cmpi sge, %11, %14 : vector<128x4xi32>
    %c1_i32 = arith.constant 1 : i32
    %16 = vector.broadcast %c1_i32 : i32 to vector<128x4xi32>
    %17 = arith.addi %12, %16 : vector<128x4xi32>
    %c32_i32_3 = arith.constant 32 : i32
    %18 = vector.broadcast %c32_i32_3 : i32 to vector<128x4xi32>
    %19 = arith.muli %17, %18 : vector<128x4xi32>
    %20 = arith.cmpi slt, %11, %19 : vector<128x4xi32>
    %21 = arith.andi %15, %20 : vector<128x4xi1>
    %22 = arith.extui %21 : vector<128x4xi1> to vector<128x4xi32>
    %23 = arith.sitofp %22 : vector<128x4xi32> to vector<128x4xf32>
    %24 = tpu.iota {dimensions = array<i32: 1>} : vector<4x128xi32>
    %25 = tpu.iota {dimensions = array<i32: 0>} : vector<4x128xi32>
    %c32_i32_4 = arith.constant 32 : i32
    %26 = vector.broadcast %c32_i32_4 : i32 to vector<4x128xi32>
    %27 = arith.muli %25, %26 : vector<4x128xi32>
    %28 = arith.cmpi sge, %24, %27 : vector<4x128xi32>
    %c1_i32_5 = arith.constant 1 : i32
    %29 = vector.broadcast %c1_i32_5 : i32 to vector<4x128xi32>
    %30 = arith.addi %25, %29 : vector<4x128xi32>
    %c32_i32_6 = arith.constant 32 : i32
    %31 = vector.broadcast %c32_i32_6 : i32 to vector<4x128xi32>
    %32 = arith.muli %30, %31 : vector<4x128xi32>
    %33 = arith.cmpi slt, %24, %32 : vector<4x128xi32>
    %34 = arith.andi %28, %33 : vector<4x128xi1>
    %35 = arith.extui %34 : vector<4x128xi1> to vector<4x128xi32>
    %36 = arith.sitofp %35 : vector<4x128xi32> to vector<4x128xf32>
    %37 = vector.shape_cast %10 : vector<8x16x128xf32> to vector<128x128xf32>
    %cst_7 = arith.constant dense<0.000000e+00> : vector<128x4xf32>
    %38 = tpu.matmul %37, %23, %cst_7 {dimension_numbers = #tpu.dot_dimension_numbers<[1], [0], [0], [1], [0, 0, 1, 1], [], []>, precision = #tpu.contract_precision<fp32>} : vector<128x128xf32>, vector<128x4xf32>, vector<128x4xf32> -> vector<128x4xf32>
    %cst_8 = arith.constant 9.99999993E-9 : f32
    %39 = vector.broadcast %cst_8 : f32 to vector<128x4xf32>
    %40 = arith.addf %38, %39 : vector<128x4xf32>
    %41 = tpu.reciprocal %40 {approx = true} : vector<128x4xf32> -> vector<128x4xf32>
    %cst_9 = arith.constant dense<0.000000e+00> : vector<128x128xf32>
    %42 = tpu.matmul %41, %36, %cst_9 {dimension_numbers = #tpu.dot_dimension_numbers<[1], [0], [0], [1], [0, 0, 1, 1], [], []>, precision = #tpu.contract_precision<fp32>} : vector<128x4xf32>, vector<4x128xf32>, vector<128x128xf32> -> vector<128x128xf32>
    %43 = arith.mulf %37, %42 : vector<128x128xf32>
    %44 = vector.shape_cast %43 : vector<128x128xf32> to vector<8x16x128xf32>
    %c0_10 = arith.constant 0 : index
    %c0_11 = arith.constant 0 : index
    %c0_12 = arith.constant 0 : index
    %45 = vector.load %arg3[%c0_10, %c0_11, %c0_12] : memref<8x16x128xf32, #tpu.memory_space<vmem>>, vector<8x16x128xf32>
    tpu.vector_store %arg3[%c0_10, %c0_11, %c0_12], %44 {strides = array<i32>} : memref<8x16x128xf32, #tpu.memory_space<vmem>>, vector<8x16x128xf32>,
    return
  }
  func.func @transform_0(%arg0: i32, %arg1: i32) -> (i32, i32, i32) {
    %c0_i32 = arith.constant 0 : i32
    %c0_i32_0 = arith.constant 0 : i32
    return %arg0, %c0_i32, %arg1 : i32, i32, i32
  }
  func.func @transform_1(%arg0: i32, %arg1: i32) -> (i32, i32, i32) {
    %c0_i32 = arith.constant 0 : i32
    %c0_i32_0 = arith.constant 0 : i32
    return %arg0, %c0_i32, %arg1 : i32, i32, i32
  }
}

</mosaic_0001>

<llo_original>
// kernel: tpu_custom_call.1
$region0: #{tpu_custom_call.1}
  #allocation0 [shape = 'u32[]', space=smem, size = 0x4, offset = 0x4, fixed_abs, tag = 'smem constant byte address 0x4 - core index']
  #allocation1 [shape = 'u32[144,128]{1,0:T(1,128)}', space=vmem, size = 0x12000, scoped, tag = 'internal scratch']
  %s0 = inlined_call_operand.hbm [shape: f32[8,16,128], index: 0, kind: input, shape index: {}]
  %s1 = inlined_call_operand.hbm [shape: f32[8,16,128], index: 1, kind: output, shape index: {}]
  %s2 = sld [smem:[#allocation0]]
  $region18: #{tpu_custom_call.1} parent=0
    _
  %s4 = ssub.s32 1, %s2
  %s5 = scalar_select 0, %s4, %s2
  $region1: #{tpu_custom_call.1} parent=0
    #allocation2 [shape = 'u8[65536]{0}', space=vmem, size = 0x10000, scoped, tag = 'input window, operand 0, single buffered']
    #allocation3 [shape = 's32[1]{0}', space=sflag, size = 0x4, scoped, tag = 'scoped memory for tpu_custom_call.1']
    #allocation4 [shape = 's32[1]{0}', space=sflag, size = 0x4, scoped, tag = 'scoped memory for tpu_custom_call.1']
    #allocation5 [shape = 'u8[65536]{0}', space=vmem, size = 0x10000, scoped, tag = 'output window, operand 0, single buffered']
    %6 = vsyncpa [#allocation3], 0
    %7 = vsyncpa [#allocation4], 0
    // Predicated region
    $region2: #{tpu_custom_call.1} parent=1 // pred_check
      _
    $region3: #{tpu_custom_call.1} parent=1 // pred_check_branch
      %9 = sbr.rel (0) target = $region5
    $region4: #{tpu_custom_call.1} parent=1 // pred_region
      %s11 = ssub.s32 2048, 2048
      %12 = vsyncadd [#allocation3], %s11
      %s13 = sshll.u32 [#allocation2], 4
      %s14 = int_to_ptr.vmem [resolvable:$true] %s13
      %19 = dma.hbm_to_vmem [thread:$0]  %s0, 2048, %s14, [#allocation3], 128, 128, 8
    $region5: #{tpu_custom_call.1} parent=1 // pred_fallthru
      _
    // Predicated region
    $region6: #{tpu_custom_call.1} parent=1 // pred_check
      _
    $region7: #{tpu_custom_call.1} parent=1 // pred_check_branch
      %21 = sbr.rel (0) target = $region9
    $region8: #{tpu_custom_call.1} parent=1 // pred_region
      %22 = dma.done [#allocation3], 2048
    $region9: #{tpu_custom_call.1} parent=1 // pred_fallthru
      _
    %v23 = vld [vmem:[#allocation2] sm:$0xff]
    %v24 = vld [vmem:[#allocation2 + $0x8] sm:$0xff]
    %v25 = vld [vmem:[#allocation2 + $0x10] sm:$0xff]
    %v26 = vld [vmem:[#allocation2 + $0x18] sm:$0xff]
    %v27 = vld [vmem:[#allocation2 + $0x20] sm:$0xff]
    %v28 = vld [vmem:[#allocation2 + $0x28] sm:$0xff]
    %v29 = vld [vmem:[#allocation2 + $0x30] sm:$0xff]
    %v30 = vld [vmem:[#allocation2 + $0x38] sm:$0xff]
    %v31 = vld [vmem:[#allocation2 + $0x40] sm:$0xff]
    %v32 = vld [vmem:[#allocation2 + $0x48] sm:$0xff]
    %v33 = vld [vmem:[#allocation2 + $0x50] sm:$0xff]
    %v34 = vld [vmem:[#allocation2 + $0x58] sm:$0xff]
    %v35 = vld [vmem:[#allocation2 + $0x60] sm:$0xff]
    %v36 = vld [vmem:[#allocation2 + $0x68] sm:$0xff]
    %v37 = vld [vmem:[#allocation2 + $0x70] sm:$0xff]
    %v38 = vld [vmem:[#allocation2 + $0x78] sm:$0xff]
    %v39 = vmax.f32 %v23, %v24
    %v40 = vrot.slane %v39, 4
    %v41 = vmax.f32 %v39, %v40
    %v42 = vrot.slane %v41, 2
    %v43 = vmax.f32 %v41, %v42
    %v44 = vrot.slane %v43, 1
    %v45 = vmax.f32 %v43, %v44
    %v46 = vmax.f32 %v25, %v26
    %v47 = vrot.slane %v46, 4
    %v48 = vmax.f32 %v46, %v47
    %v49 = vrot.slane %v48, 2
    %v50 = vmax.f32 %v48, %v49
    %v51 = vrot.slane %v50, 1
    %v52 = vmax.f32 %v50, %v51
    %v53 = vmax.f32 %v27, %v28
    %v54 = vrot.slane %v53, 4
    %v55 = vmax.f32 %v53, %v54
    %v56 = vrot.slane %v55, 2
    %v57 = vmax.f32 %v55, %v56
    %v58 = vrot.slane %v57, 1
    %v59 = vmax.f32 %v57, %v58
    %v60 = vmax.f32 %v29, %v30
    %v61 = vrot.slane %v60, 4
    %v62 = vmax.f32 %v60, %v61
    %v63 = vrot.slane %v62, 2
    %v64 = vmax.f32 %v62, %v63
    %v65 = vrot.slane %v64, 1
    %v66 = vmax.f32 %v64, %v65
    %v67 = vmax.f32 %v31, %v32
    %v68 = vrot.slane %v67, 4
    %v69 = vmax.f32 %v67, %v68
    %v70 = vrot.slane %v69, 2
    %v71 = vmax.f32 %v69, %v70
    %v72 = vrot.slane %v71, 1
    %v73 = vmax.f32 %v71, %v72
    %v74 = vmax.f32 %v33, %v34
    %v75 = vrot.slane %v74, 4
    %v76 = vmax.f32 %v74, %v75
    %v77 = vrot.slane %v76, 2
    %v78 = vmax.f32 %v76, %v77
    %v79 = vrot.slane %v78, 1
    %v80 = vmax.f32 %v78, %v79
    %v81 = vmax.f32 %v35, %v36
    %v82 = vrot.slane %v81, 4
    %v83 = vmax.f32 %v81, %v82
    %v84 = vrot.slane %v83, 2
    %v85 = vmax.f32 %v83, %v84
    %v86 = vrot.slane %v85, 1
    %v87 = vmax.f32 %v85, %v86
    %v88 = vmax.f32 %v37, %v38
    %v89 = vrot.slane %v88, 4
    %v90 = vmax.f32 %v88, %v89
    %v91 = vrot.slane %v90, 2
    %v92 = vmax.f32 %v90, %v91
    %v93 = vrot.slane %v92, 1
    %v94 = vmax.f32 %v92, %v93
    %v95 = vsub.f32 %v23, %v45
    %v96 = vsub.f32 %v24, %v45
    %v97 = vsub.f32 %v25, %v52
    %v98 = vsub.f32 %v26, %v52
    %v99 = vsub.f32 %v27, %v59
    %v100 = vsub.f32 %v28, %v59
    %v101 = vsub.f32 %v29, %v66
    %v102 = vsub.f32 %v30, %v66
    %v103 = vsub.f32 %v31, %v73
    %v104 = vsub.f32 %v32, %v73
    %v105 = vsub.f32 %v33, %v80
    %v106 = vsub.f32 %v34, %v80
    %v107 = vsub.f32 %v35, %v87
    %v108 = vsub.f32 %v36, %v87
    %v109 = vsub.f32 %v37, %v94
    %v110 = vsub.f32 %v38, %v94
    %v111 = vmul.f32 %v95, 1.442695
    %v112 = vpow.pop %v111
    %v113 = vmul.f32 %v96, 1.442695
    %v114 = vpow.pop %v113
    %v115 = vmul.f32 %v97, 1.442695
    %v116 = vpow.pop %v115
    %v117 = vmul.f32 %v98, 1.442695
    %v118 = vpow.pop %v117
    %v119 = vmul.f32 %v99, 1.442695
    %v120 = vpow.pop %v119
    %v121 = vmul.f32 %v100, 1.442695
    %v122 = vpow.pop %v121
    %v123 = vmul.f32 %v101, 1.442695
    %v124 = vpow.pop %v123
    %v125 = vmul.f32 %v102, 1.442695
    %v126 = vpow.pop %v125
    %v127 = vmul.f32 %v103, 1.442695
    %v128 = vpow.pop %v127
    %v129 = vmul.f32 %v104, 1.442695
    %v130 = vpow.pop %v129
    %v131 = vmul.f32 %v105, 1.442695
    %v132 = vpow.pop %v131
    %v133 = vmul.f32 %v106, 1.442695
    %v134 = vpow.pop %v133
    %v135 = vmul.f32 %v107, 1.442695
    %v136 = vpow.pop %v135
    %v137 = vmul.f32 %v108, 1.442695
    %v138 = vpow.pop %v137
    %v139 = vmul.f32 %v109, 1.442695
    %v140 = vpow.pop %v139
    %v141 = vmul.f32 %v110, 1.442695
    %v142 = vpow.pop %v141
    %v143 = vadd.f32 %v112, %v114
    %v144 = vrot.slane %v143, 4
    %v145 = vadd.f32 %v143, %v144
    %v146 = vrot.slane %v145, 2
    %v147 = vadd.f32 %v145, %v146
    %v148 = vrot.slane %v147, 1
    %v149 = vadd.f32 %v147, %v148
    %v150 = vadd.f32 %v116, %v118
    %v151 = vrot.slane %v150, 4
    %v152 = vadd.f32 %v150, %v151
    %v153 = vrot.slane %v152, 2
    %v154 = vadd.f32 %v152, %v153
    %v155 = vrot.slane %v154, 1
    %v156 = vadd.f32 %v154, %v155
    %v157 = vadd.f32 %v120, %v122
    %v158 = vrot.slane %v157, 4
    %v159 = vadd.f32 %v157, %v158
    %v160 = vrot.slane %v159, 2
    %v161 = vadd.f32 %v159, %v160
    %v162 = vrot.slane %v161, 1
    %v163 = vadd.f32 %v161, %v162
    %v164 = vadd.f32 %v124, %v126
    %v165 = vrot.slane %v164, 4
    %v166 = vadd.f32 %v164, %v165
    %v167 = vrot.slane %v166, 2
    %v168 = vadd.f32 %v166, %v167
    %v169 = vrot.slane %v168, 1
    %v170 = vadd.f32 %v168, %v169
    %v171 = vadd.f32 %v128, %v130
    %v172 = vrot.slane %v171, 4
    %v173 = vadd.f32 %v171, %v172
    %v174 = vrot.slane %v173, 2
    %v175 = vadd.f32 %v173, %v174
    %v176 = vrot.slane %v175, 1
    %v177 = vadd.f32 %v175, %v176
    %v178 = vadd.f32 %v132, %v134
    %v179 = vrot.slane %v178, 4
    %v180 = vadd.f32 %v178, %v179
    %v181 = vrot.slane %v180, 2
    %v182 = vadd.f32 %v180, %v181
    %v183 = vrot.slane %v182, 1
    %v184 = vadd.f32 %v182, %v183
    %v185 = vadd.f32 %v136, %v138
    %v186 = vrot.slane %v185, 4
    %v187 = vadd.f32 %v185, %v186
    %v188 = vrot.slane %v187, 2
    %v189 = vadd.f32 %v187, %v188
    %v190 = vrot.slane %v189, 1
    %v191 = vadd.f32 %v189, %v190
    %v192 = vadd.f32 %v140, %v142
    %v193 = vrot.slane %v192, 4
    %v194 = vadd.f32 %v192, %v193
    %v195 = vrot.slane %v194, 2
    %v196 = vadd.f32 %v194, %v195
    %v197 = vrot.slane %v196, 1
    %v198 = vadd.f32 %v196, %v197
    %v199 = vrcp.pop %v149
    %v200 = vrcp.pop %v156
    %v201 = vrcp.pop %v163
    %v202 = vrcp.pop %v170
    %v203 = vrcp.pop %v177
    %v204 = vrcp.pop %v184
    %v205 = vrcp.pop %v191
    %v206 = vrcp.pop %v198
    %v207 = vmul.f32 %v112, %v199
    %v208 = vmul.f32 %v114, %v199
    %v209 = vmul.f32 %v116, %v200
    %v210 = vmul.f32 %v118, %v200
    %v211 = vmul.f32 %v120, %v201
    %v212 = vmul.f32 %v122, %v201
    %v213 = vmul.f32 %v124, %v202
    %v214 = vmul.f32 %v126, %v202
    %v215 = vmul.f32 %v128, %v203
    %v216 = vmul.f32 %v130, %v203
    %v217 = vmul.f32 %v132, %v204
    %v218 = vmul.f32 %v134, %v204
    %v219 = vmul.f32 %v136, %v205
    %v220 = vmul.f32 %v138, %v205
    %v221 = vmul.f32 %v140, %v206
    %v222 = vmul.f32 %v142, %v206
    %v223 = vlaneseq
    %v224 = vshrl.u32 %v223, 7
    %v225 = vadd.s32 %v224, 8
    %v226 = vadd.s32 %v224, 16
    %v227 = vadd.s32 %v224, 24
    %v228 = vadd.s32 %v224, 32
    %v229 = vadd.s32 %v224, 40
    %v230 = vadd.s32 %v224, 48
    %v231 = vadd.s32 %v224, 56
    %v232 = vadd.s32 %v224, 64
    %v233 = vadd.s32 %v224, 72
    %v234 = vadd.s32 %v224, 80
    %v235 = vadd.s32 %v224, 88
    %v236 = vadd.s32 %v224, 96
    %v237 = vadd.s32 %v224, 104
    %v238 = vadd.s32 %v224, 112
    %v239 = vadd.s32 %v224, 120
    %v240 = vlaneseq
    %v241 = vand.u32 %v240, 127
    %v242 = vmul.u32 %v241, 32
    %vm243 = vcmp.ge.s32.totalorder %v224, %v242
    %vm244 = vcmp.ge.s32.totalorder %v225, %v242
    %vm245 = vcmp.ge.s32.totalorder %v226, %v242
    %vm246 = vcmp.ge.s32.totalorder %v227, %v242
    %vm247 = vcmp.ge.s32.totalorder %v228, %v242
    %vm248 = vcmp.ge.s32.totalorder %v229, %v242
    %vm249 = vcmp.ge.s32.totalorder %v230, %v242
    %vm250 = vcmp.ge.s32.totalorder %v231, %v242
    %vm251 = vcmp.ge.s32.totalorder %v232, %v242
    %vm252 = vcmp.ge.s32.totalorder %v233, %v242
    %vm253 = vcmp.ge.s32.totalorder %v234, %v242
    %vm254 = vcmp.ge.s32.totalorder %v235, %v242
    %vm255 = vcmp.ge.s32.totalorder %v236, %v242
    %vm256 = vcmp.ge.s32.totalorder %v237, %v242
    %vm257 = vcmp.ge.s32.totalorder %v238, %v242
    %vm258 = vcmp.ge.s32.totalorder %v239, %v242
    %v259 = vadd.s32 %v241, 1
    %v260 = vmul.u32 %v259, 32
    %vm261 = vcmp.lt.s32.totalorder %v224, %v260
    %vm262 = vcmp.lt.s32.totalorder %v225, %v260
    %vm263 = vcmp.lt.s32.totalorder %v226, %v260
    %vm264 = vcmp.lt.s32.totalorder %v227, %v260
    %vm265 = vcmp.lt.s32.totalorder %v228, %v260
    %vm266 = vcmp.lt.s32.totalorder %v229, %v260
    %vm267 = vcmp.lt.s32.totalorder %v230, %v260
    %vm268 = vcmp.lt.s32.totalorder %v231, %v260
    %vm269 = vcmp.lt.s32.totalorder %v232, %v260
    %vm270 = vcmp.lt.s32.totalorder %v233, %v260
    %vm271 = vcmp.lt.s32.totalorder %v234, %v260
    %vm272 = vcmp.lt.s32.totalorder %v235, %v260
    %vm273 = vcmp.lt.s32.totalorder %v236, %v260
    %vm274 = vcmp.lt.s32.totalorder %v237, %v260
    %vm275 = vcmp.lt.s32.totalorder %v238, %v260
    %vm276 = vcmp.lt.s32.totalorder %v239, %v260
    %vm277 = vmand %vm243, %vm261
    %vm278 = vmand %vm244, %vm262
    %vm279 = vmand %vm245, %vm263
    %vm280 = vmand %vm246, %vm264
    %vm281 = vmand %vm247, %vm265
    %vm282 = vmand %vm248, %vm266
    %vm283 = vmand %vm249, %vm267
    %vm284 = vmand %vm250, %vm268
    %vm285 = vmand %vm251, %vm269
    %vm286 = vmand %vm252, %vm270
    %vm287 = vmand %vm253, %vm271
    %vm288 = vmand %vm254, %vm272
    %vm289 = vmand %vm255, %vm273
    %vm290 = vmand %vm256, %vm274
    %vm291 = vmand %vm257, %vm275
    %vm292 = vmand %vm258, %vm276
    %v293 = vsel %vm277, 1, 0
    %v294 = vsel %vm278, 1, 0
    %v295 = vsel %vm279, 1, 0
    %v296 = vsel %vm280, 1, 0
    %v297 = vsel %vm281, 1, 0
    %v298 = vsel %vm282, 1, 0
    %v299 = vsel %vm283, 1, 0
    %v300 = vsel %vm284, 1, 0
    %v301 = vsel %vm285, 1, 0
    %v302 = vsel %vm286, 1, 0
    %v303 = vsel %vm287, 1, 0
    %v304 = vsel %vm288, 1, 0
    %v305 = vsel %vm289, 1, 0
    %v306 = vsel %vm290, 1, 0
    %v307 = vsel %vm291, 1, 0
    %v308 = vsel %vm292, 1, 0
    %v309 = vcvt.s32.f32 %v293
    %v310 = vcvt.s32.f32 %v294
    %v311 = vcvt.s32.f32 %v295
    %v312 = vcvt.s32.f32 %v296
    %v313 = vcvt.s32.f32 %v297
    %v314 = vcvt.s32.f32 %v298
    %v315 = vcvt.s32.f32 %v299
    %v316 = vcvt.s32.f32 %v300
    %v317 = vcvt.s32.f32 %v301
    %v318 = vcvt.s32.f32 %v302
    %v319 = vcvt.s32.f32 %v303
    %v320 = vcvt.s32.f32 %v304
    %v321 = vcvt.s32.f32 %v305
    %v322 = vcvt.s32.f32 %v306
    %v323 = vcvt.s32.f32 %v307
    %v324 = vcvt.s32.f32 %v308
    %v325 = vmul.u32 %v224, 32
    %vm326 = vcmp.ge.s32.totalorder %v241, %v325
    %v327 = vadd.s32 %v224, 1
    %v328 = vmul.u32 %v327, 32
    %vm329 = vcmp.lt.s32.totalorder %v241, %v328
    %vm330 = vmand %vm326, %vm329
    %v331 = vsel %vm330, 1, 0
    %v332 = vcvt.s32.f32 %v331
    %333 = vmatprep.subr.mxu0 0.0
    %v334 = vand.u32 %v309, 4294901760
    %335 = vmatpush1.msra.mxu0 %v334
    %336 = vmatprep.subr.mxu0 0.0
    %v337 = vand.u32 %v310, 4294901760
    %338 = vmatpush1.msra.mxu0 %v337
    %339 = vmatprep.subr.mxu0 0.0
    %v340 = vand.u32 %v311, 4294901760
    %341 = vmatpush1.msra.mxu0 %v340
    %342 = vmatprep.subr.mxu0 0.0
    %v343 = vand.u32 %v312, 4294901760
    %344 = vmatpush1.msra.mxu0 %v343
    %345 = vmatprep.subr.mxu0 0.0
    %v346 = vand.u32 %v313, 4294901760
    %347 = vmatpush1.msra.mxu0 %v346
    %348 = vmatprep.subr.mxu0 0.0
    %v349 = vand.u32 %v314, 4294901760
    %350 = vmatpush1.msra.mxu0 %v349
    %351 = vmatprep.subr.mxu0 0.0
    %v352 = vand.u32 %v315, 4294901760
    %353 = vmatpush1.msra.mxu0 %v352
    %354 = vmatprep.subr.mxu0 0.0
    %v355 = vand.u32 %v316, 4294901760
    %356 = vmatpush1.msra.mxu0 %v355
    %357 = vmatprep.subr.mxu0 0.0
    %v358 = vand.u32 %v317, 4294901760
    %359 = vmatpush1.msra.mxu0 %v358
    %360 = vmatprep.subr.mxu0 0.0
    %v361 = vand.u32 %v318, 4294901760
    %362 = vmatpush1.msra.mxu0 %v361
    %363 = vmatprep.subr.mxu0 0.0
    %v364 = vand.u32 %v319, 4294901760
    %365 = vmatpush1.msra.mxu0 %v364
    %366 = vmatprep.subr.mxu0 0.0
    %v367 = vand.u32 %v320, 4294901760
    %368 = vmatpush1.msra.mxu0 %v367
    %369 = vmatprep.subr.mxu0 0.0
    %v370 = vand.u32 %v321, 4294901760
    %371 = vmatpush1.msra.mxu0 %v370
    %372 = vmatprep.subr.mxu0 0.0
    %v373 = vand.u32 %v322, 4294901760
    %374 = vmatpush1.msra.mxu0 %v373
    %375 = vmatprep.subr.mxu0 0.0
    %v376 = vand.u32 %v323, 4294901760
    %377 = vmatpush1.msra.mxu0 %v376
    %378 = vmatprep.subr.mxu0 0.0
    %v379 = vand.u32 %v324, 4294901760
    %380 = vmatpush1.msra.mxu0 %v379
    %381 = vmatprep.subr.mxu0 0.0
    %382 = vmatpush1.msra.mxu0 0.0
    %383 = vmatprep.subr.mxu0 0.0
    %384 = vmatpush1.msra.mxu0 0.0
    %385 = vmatprep.subr.mxu0 0.0
    %386 = vmatpush1.msra.mxu0 0.0
    %387 = vmatprep.subr.mxu0 0.0
    %388 = vmatpush1.msra.mxu0 0.0
    %389 = vmatprep.subr.mxu0 0.0
    %390 = vmatpush1.msra.mxu0 0.0
    %391 = vmatprep.subr.mxu0 0.0
    %392 = vmatpush1.msra.mxu0 0.0
    %393 = vmatprep.subr.mxu0 0.0
    %394 = vmatpush1.msra.mxu0 0.0
    %395 = vmatprep.subr.mxu0 0.0
    %396 = vmatpush1.msra.mxu0 0.0
    %397 = vmatprep.subr.mxu0 0.0
    %398 = vmatpush1.msra.mxu0 0.0
    %399 = vmatprep.subr.mxu0 0.0
    %400 = vmatpush1.msra.mxu0 0.0
    %401 = vmatprep.subr.mxu0 0.0
    %402 = vmatpush1.msra.mxu0 0.0
    %403 = vmatprep.subr.mxu0 0.0
    %404 = vmatpush1.msra.mxu0 0.0
    %405 = vmatprep.subr.mxu0 0.0
    %406 = vmatpush1.msra.mxu0 0.0
    %407 = vmatprep.subr.mxu0 0.0
    %408 = vmatpush1.msra.mxu0 0.0
    %409 = vmatprep.subr.mxu0 0.0
    %410 = vmatpush1.msra.mxu0 0.0
    %411 = vmatprep.subr.mxu0 0.0
    %412 = vmatpush1.msra.mxu0 0.0
    %413 = vmatprep.mubr.f32.mxu0 0.0
    %v414 = vand.u32 %v207, 4294901760
    %v415 = vsub.f32 %v207, %v414
    %v416 = vand.u32 %v415, 4294901760
    %v417 = vsub.f32 %v415, %v416
    %v418 = vand.u32 %v417, 4294901760
    %419 = vmatmul.mubr.f32.gmra.mrb[0].mxu0 %v418
    %v420 = vpop.f32.mrb[0].mxu0
    %v421 = vadd.f32 1e-08, %v420
    %v422 = vpop.f32.mrb[0].mxu0
    %423 = vmatprep.mubr.f32.mxu0 0.0
    %v424 = vand.u32 %v208, 4294901760
    %v425 = vsub.f32 %v208, %v424
    %v426 = vand.u32 %v425, 4294901760
    %v427 = vsub.f32 %v425, %v426
    %v428 = vand.u32 %v427, 4294901760
    %429 = vmatmul.mubr.f32.gmra.mrb[0].mxu0 %v428
    %v430 = vpop.f32.mrb[0].mxu0
    %v431 = vadd.f32 1e-08, %v430
    %v432 = vpop.f32.mrb[0].mxu0
    %433 = vmatprep.mubr.f32.mxu0 0.0
    %v434 = vand.u32 %v209, 4294901760
    %v435 = vsub.f32 %v209, %v434
    %v436 = vand.u32 %v435, 4294901760
    %v437 = vsub.f32 %v435, %v436
    %v438 = vand.u32 %v437, 4294901760
    %439 = vmatmul.mubr.f32.gmra.mrb[0].mxu0 %v438
    %v440 = vpop.f32.mrb[0].mxu0
    %v441 = vadd.f32 1e-08, %v440
    %v442 = vpop.f32.mrb[0].mxu0
    %443 = vmatprep.mubr.f32.mxu0 0.0
    %v444 = vand.u32 %v210, 4294901760
    %v445 = vsub.f32 %v210, %v444
    %v446 = vand.u32 %v445, 4294901760
    %v447 = vsub.f32 %v445, %v446
    %v448 = vand.u32 %v447, 4294901760
    %449 = vmatmul.mubr.f32.gmra.mrb[0].mxu0 %v448
    %v450 = vpop.f32.mrb[0].mxu0
    %v451 = vadd.f32 1e-08, %v450
    %v452 = vpop.f32.mrb[0].mxu0
    %453 = vmatprep.mubr.f32.mxu0 0.0
    %v454 = vand.u32 %v211, 4294901760
    %v455 = vsub.f32 %v211, %v454
    %v456 = vand.u32 %v455, 4294901760
    %v457 = vsub.f32 %v455, %v456
    %v458 = vand.u32 %v457, 4294901760
    %459 = vmatmul.mubr.f32.gmra.mrb[0].mxu0 %v458
    %v460 = vpop.f32.mrb[0].mxu0
    %v461 = vadd.f32 1e-08, %v460
    %v462 = vpop.f32.mrb[0].mxu0
    %463 = vmatprep.mubr.f32.mxu0 0.0
    %v464 = vand.u32 %v212, 4294901760
    %v465 = vsub.f32 %v212, %v464
    %v466 = vand.u32 %v465, 4294901760
    %v467 = vsub.f32 %v465, %v466
    %v468 = vand.u32 %v467, 4294901760
    %469 = vmatmul.mubr.f32.gmra.mrb[0].mxu0 %v468
    %v470 = vpop.f32.mrb[0].mxu0
    %v471 = vadd.f32 1e-08, %v470
    %v472 = vpop.f32.mrb[0].mxu0
    %473 = vmatprep.mubr.f32.mxu0 0.0
    %v474 = vand.u32 %v213, 4294901760
    %v475 = vsub.f32 %v213, %v474
    %v476 = vand.u32 %v475, 4294901760
    %v477 = vsub.f32 %v475, %v476
    %v478 = vand.u32 %v477, 4294901760
    %479 = vmatmul.mubr.f32.gmra.mrb[0].mxu0 %v478
    %v480 = vpop.f32.mrb[0].mxu0
    %v481 = vadd.f32 1e-08, %v480
    %v482 = vpop.f32.mrb[0].mxu0
    %483 = vmatprep.mubr.f32.mxu0 0.0
    %v484 = vand.u32 %v214, 4294901760
    %v485 = vsub.f32 %v214, %v484
    %v486 = vand.u32 %v485, 4294901760
    %v487 = vsub.f32 %v485, %v486
    %v488 = vand.u32 %v487, 4294901760
    %489 = vmatmul.mubr.f32.gmra.mrb[0].mxu0 %v488
    %v490 = vpop.f32.mrb[0].mxu0
    %v491 = vadd.f32 1e-08, %v490
    %v492 = vpop.f32.mrb[0].mxu0
    %493 = vmatprep.mubr.f32.mxu0 0.0
    %v494 = vand.u32 %v215, 4294901760
    %v495 = vsub.f32 %v215, %v494
    %v496 = vand.u32 %v495, 4294901760
    %v497 = vsub.f32 %v495, %v496
    %v498 = vand.u32 %v497, 4294901760
    %499 = vmatmul.mubr.f32.gmra.mrb[0].mxu0 %v498
    %v500 = vpop.f32.mrb[0].mxu0
    %v501 = vadd.f32 1e-08, %v500
    %v502 = vpop.f32.mrb[0].mxu0
    %503 = vmatprep.mubr.f32.mxu0 0.0
    %v504 = vand.u32 %v216, 4294901760
    %v505 = vsub.f32 %v216, %v504
    %v506 = vand.u32 %v505, 4294901760
    %v507 = vsub.f32 %v505, %v506
    %v508 = vand.u32 %v507, 4294901760
    %509 = vmatmul.mubr.f32.gmra.mrb[0].mxu0 %v508
    %v510 = vpop.f32.mrb[0].mxu0
    %v511 = vadd.f32 1e-08, %v510
    %v512 = vpop.f32.mrb[0].mxu0
    %513 = vmatprep.mubr.f32.mxu0 0.0
    %v514 = vand.u32 %v217, 4294901760
    %v515 = vsub.f32 %v217, %v514
    %v516 = vand.u32 %v515, 4294901760
    %v517 = vsub.f32 %v515, %v516
    %v518 = vand.u32 %v517, 4294901760
    %519 = vmatmul.mubr.f32.gmra.mrb[0].mxu0 %v518
    %v520 = vpop.f32.mrb[0].mxu0
    %v521 = vadd.f32 1e-08, %v520
    %v522 = vpop.f32.mrb[0].mxu0
    %523 = vmatprep.mubr.f32.mxu0 0.0
    %v524 = vand.u32 %v218, 4294901760
    %v525 = vsub.f32 %v218, %v524
    %v526 = vand.u32 %v525, 4294901760
    %v527 = vsub.f32 %v525, %v526
    %v528 = vand.u32 %v527, 4294901760
    %529 = vmatmul.mubr.f32.gmra.mrb[0].mxu0 %v528
    %v530 = vpop.f32.mrb[0].mxu0
    %v531 = vadd.f32 1e-08, %v530
    %v532 = vpop.f32.mrb[0].mxu0
    %533 = vmatprep.mubr.f32.mxu0 0.0
    %v534 = vand.u32 %v219, 4294901760
    %v535 = vsub.f32 %v219, %v534
    %v536 = vand.u32 %v535, 4294901760
    %v537 = vsub.f32 %v535, %v536
    %v538 = vand.u32 %v537, 4294901760
    %539 = vmatmul.mubr.f32.gmra.mrb[0].mxu0 %v538
    %v540 = vpop.f32.mrb[0].mxu0
    %v541 = vadd.f32 1e-08, %v540
    %v542 = vpop.f32.mrb[0].mxu0
    %543 = vmatprep.mubr.f32.mxu0 0.0
    %v544 = vand.u32 %v220, 4294901760
    %v545 = vsub.f32 %v220, %v544
    %v546 = vand.u32 %v545, 4294901760
    %v547 = vsub.f32 %v545, %v546
    %v548 = vand.u32 %v547, 4294901760
    %549 = vmatmul.mubr.f32.gmra.mrb[0].mxu0 %v548
    %v550 = vpop.f32.mrb[0].mxu0
    %v551 = vadd.f32 1e-08, %v550
    %v552 = vpop.f32.mrb[0].mxu0
    %553 = vmatprep.mubr.f32.mxu0 0.0
    %v554 = vand.u32 %v221, 4294901760
    %v555 = vsub.f32 %v221, %v554
    %v556 = vand.u32 %v555, 4294901760
    %v557 = vsub.f32 %v555, %v556
    %v558 = vand.u32 %v557, 4294901760
    %559 = vmatmul.mubr.f32.gmra.mrb[0].mxu0 %v558
    %v560 = vpop.f32.mrb[0].mxu0
    %v561 = vadd.f32 1e-08, %v560
    %v562 = vpop.f32.mrb[0].mxu0
    %563 = vmatprep.mubr.f32.mxu0 0.0
    %v564 = vand.u32 %v222, 4294901760
    %v565 = vsub.f32 %v222, %v564
    %v566 = vand.u32 %v565, 4294901760
    %v567 = vsub.f32 %v565, %v566
    %v568 = vand.u32 %v567, 4294901760
    %569 = vmatmul.mubr.f32.gmra.mrb[0].mxu0 %v568
    %v570 = vpop.f32.mrb[0].mxu0
    %v571 = vadd.f32 1e-08, %v570
    %v572 = vpop.f32.mrb[0].mxu0
    %573 = vdwg.mxu0
    %574 = vmatprep.subr.mxu0 0.0
    %v575 = vand.u32 %v309, 4294901760
    %v576 = vsub.f32 %v309, %v575
    %v577 = vand.u32 %v576, 4294901760
    %v578 = vsub.f32 %v576, %v577
    %v579 = vand.u32 %v578, 4294901760
    %580 = vmatpush1.msra.mxu0 %v579
    %581 = vmatprep.subr.mxu0 0.0
    %v582 = vand.u32 %v310, 4294901760
    %v583 = vsub.f32 %v310, %v582
    %v584 = vand.u32 %v583, 4294901760
    %v585 = vsub.f32 %v583, %v584
    %v586 = vand.u32 %v585, 4294901760
    %587 = vmatpush1.msra.mxu0 %v586
    %588 = vmatprep.subr.mxu0 0.0
    %v589 = vand.u32 %v311, 4294901760
    %v590 = vsub.f32 %v311, %v589
    %v591 = vand.u32 %v590, 4294901760
    %v592 = vsub.f32 %v590, %v591
    %v593 = vand.u32 %v592, 4294901760
    %594 = vmatpush1.msra.mxu0 %v593
    %595 = vmatprep.subr.mxu0 0.0
    %v596 = vand.u32 %v312, 4294901760
    %v597 = vsub.f32 %v312, %v596
    %v598 = vand.u32 %v597, 4294901760
    %v599 = vsub.f32 %v597, %v598
    %v600 = vand.u32 %v599, 4294901760
    %601 = vmatpush1.msra.mxu0 %v600
    %602 = vmatprep.subr.mxu0 0.0
    %v603 = vand.u32 %v313, 4294901760
    %v604 = vsub.f32 %v313, %v603
    %v605 = vand.u32 %v604, 4294901760
    %v606 = vsub.f32 %v604, %v605
    %v607 = vand.u32 %v606, 4294901760
    %608 = vmatpush1.msra.mxu0 %v607
    %609 = vmatprep.subr.mxu0 0.0
    %v610 = vand.u32 %v314, 4294901760
    %v611 = vsub.f32 %v314, %v610
    %v612 = vand.u32 %v611, 4294901760
    %v613 = vsub.f32 %v611, %v612
    %v614 = vand.u32 %v613, 4294901760
    %615 = vmatpush1.msra.mxu0 %v614
    %616 = vmatprep.subr.mxu0 0.0
    %v617 = vand.u32 %v315, 4294901760
    %v618 = vsub.f32 %v315, %v617
    %v619 = vand.u32 %v618, 4294901760
    %v620 = vsub.f32 %v618, %v619
    %v621 = vand.u32 %v620, 4294901760
    %622 = vmatpush1.msra.mxu0 %v621
    %623 = vmatprep.subr.mxu0 0.0
    %v624 = vand.u32 %v316, 4294901760
    %v625 = vsub.f32 %v316, %v624
    %v626 = vand.u32 %v625, 4294901760
    %v627 = vsub.f32 %v625, %v626
    %v628 = vand.u32 %v627, 4294901760
    %629 = vmatpush1.msra.mxu0 %v628
    %630 = vmatprep.subr.mxu0 0.0
    %v631 = vand.u32 %v317, 4294901760
    %v632 = vsub.f32 %v317, %v631
    %v633 = vand.u32 %v632, 4294901760
    %v634 = vsub.f32 %v632, %v633
    %v635 = vand.u32 %v634, 4294901760
    %636 = vmatpush1.msra.mxu0 %v635
    %637 = vmatprep.subr.mxu0 0.0
    %v638 = vand.u32 %v318, 4294901760
    %v639 = vsub.f32 %v318, %v638
    %v640 = vand.u32 %v639, 4294901760
    %v641 = vsub.f32 %v639, %v640
    %v642 = vand.u32 %v641, 4294901760
    %643 = vmatpush1.msra.mxu0 %v642
    %644 = vmatprep.subr.mxu0 0.0
    %v645 = vand.u32 %v319, 4294901760
    %v646 = vsub.f32 %v319, %v645
    %v647 = vand.u32 %v646, 4294901760
    %v648 = vsub.f32 %v646, %v647
    %v649 = vand.u32 %v648, 4294901760
    %650 = vmatpush1.msra.mxu0 %v649
    %651 = vmatprep.subr.mxu0 0.0
    %v652 = vand.u32 %v320, 4294901760
    %v653 = vsub.f32 %v320, %v652
    %v654 = vand.u32 %v653, 4294901760
    %v655 = vsub.f32 %v653, %v654
    %v656 = vand.u32 %v655, 4294901760
    %657 = vmatpush1.msra.mxu0 %v656
    %658 = vmatprep.subr.mxu0 0.0
    %v659 = vand.u32 %v321, 4294901760
    %v660 = vsub.f32 %v321, %v659
    %v661 = vand.u32 %v660, 4294901760
    %v662 = vsub.f32 %v660, %v661
    %v663 = vand.u32 %v662, 4294901760
    %664 = vmatpush1.msra.mxu0 %v663
    %665 = vmatprep.subr.mxu0 0.0
    %v666 = vand.u32 %v322, 4294901760
    %v667 = vsub.f32 %v322, %v666
    %v668 = vand.u32 %v667, 4294901760
    %v669 = vsub.f32 %v667, %v668
    %v670 = vand.u32 %v669, 4294901760
    %671 = vmatpush1.msra.mxu0 %v670
    %672 = vmatprep.subr.mxu0 0.0
    %v673 = vand.u32 %v323, 4294901760
    %v674 = vsub.f32 %v323, %v673
    %v675 = vand.u32 %v674, 4294901760
    %v676 = vsub.f32 %v674, %v675
    %v677 = vand.u32 %v676, 4294901760
    %678 = vmatpush1.msra.mxu0 %v677
    %679 = vmatprep.subr.mxu0 0.0
    %v680 = vand.u32 %v324, 4294901760
    %v681 = vsub.f32 %v324, %v680
    %v682 = vand.u32 %v681, 4294901760
    %v683 = vsub.f32 %v681, %v682
    %v684 = vand.u32 %v683, 4294901760
    %685 = vmatpush1.msra.mxu0 %v684
    %686 = vmatprep.subr.mxu0 0.0
    %687 = vmatpush1.msra.mxu0 0.0
    %688 = vmatprep.subr.mxu0 0.0
    %689 = vmatpush1.msra.mxu0 0.0
    %690 = vmatprep.subr.mxu0 0.0
    %691 = vmatpush1.msra.mxu0 0.0
    %692 = vmatprep.subr.mxu0 0.0
    %693 = vmatpush1.msra.mxu0 0.0
    %694 = vmatprep.subr.mxu0 0.0
    %695 = vmatpush1.msra.mxu0 0.0
    %696 = vmatprep.subr.mxu0 0.0
    %697 = vmatpush1.msra.mxu0 0.0
    %698 = vmatprep.subr.mxu0 0.0
    %699 = vmatpush1.msra.mxu0 0.0
    %700 = vmatprep.subr.mxu0 0.0
    %701 = vmatpush1.msra.mxu0 0.0
    %702 = vmatprep.subr.mxu0 0.0
    %703 = vmatpush1.msra.mxu0 0.0
    %704 = vmatprep.subr.mxu0 0.0
    %705 = vmatpush1.msra.mxu0 0.0
    %706 = vmatprep.subr.mxu0 0.0
    %707 = vmatpush1.msra.mxu0 0.0
    %708 = vmatprep.subr.mxu0 0.0
    %709 = vmatpush1.msra.mxu0 0.0
    %710 = vmatprep.subr.mxu0 0.0
    %711 = vmatpush1.msra.mxu0 0.0
    %712 = vmatprep.subr.mxu0 0.0
    %713 = vmatpush1.msra.mxu0 0.0
    %714 = vmatprep.subr.mxu0 0.0
    %715 = vmatpush1.msra.mxu0 0.0
    %716 = vmatprep.subr.mxu0 0.0
    %717 = vmatpush1.msra.mxu0 0.0
    %718 = vmatprep.mubr.f32.mxu0 0.0
    %v719 = vand.u32 %v207, 4294901760
    %720 = vmatmul.mubr.f32.gmra.mrb[0].mxu0 %v719
    %v721 = vpop.f32.mrb[0].mxu0
    %v722 = vadd.f32 %v421, %v721
    %v723 = vpop.f32.mrb[0].mxu0
    %724 = vmatprep.mubr.f32.mxu0 0.0
    %v725 = vand.u32 %v208, 4294901760
    %726 = vmatmul.mubr.f32.gmra.mrb[0].mxu0 %v725
    %v727 = vpop.f32.mrb[0].mxu0
    %v728 = vadd.f32 %v431, %v727
    %v729 = vpop.f32.mrb[0].mxu0
    %730 = vmatprep.mubr.f32.mxu0 0.0
    %v731 = vand.u32 %v209, 4294901760
    %732 = vmatmul.mubr.f32.gmra.mrb[0].mxu0 %v731
    %v733 = vpop.f32.mrb[0].mxu0
    %v734 = vadd.f32 %v441, %v733
    %v735 = vpop.f32.mrb[0].mxu0
    %736 = vmatprep.mubr.f32.mxu0 0.0
    %v737 = vand.u32 %v210, 4294901760
    %738 = vmatmul.mubr.f32.gmra.mrb[0].mxu0 %v737
    %v739 = vpop.f32.mrb[0].mxu0
    %v740 = vadd.f32 %v451, %v739
    %v741 = vpop.f32.mrb[0].mxu0
    %742 = vmatprep.mubr.f32.mxu0 0.0
    %v743 = vand.u32 %v211, 4294901760
    %744 = vmatmul.mubr.f32.gmra.mrb[0].mxu0 %v743
    %v745 = vpop.f32.mrb[0].mxu0
    %v746 = vadd.f32 %v461, %v745
    %v747 = vpop.f32.mrb[0].mxu0
    %748 = vmatprep.mubr.f32.mxu0 0.0
    %v749 = vand.u32 %v212, 4294901760
    %750 = vmatmul.mubr.f32.gmra.mrb[0].mxu0 %v749
    %v751 = vpop.f32.mrb[0].mxu0
    %v752 = vadd.f32 %v471, %v751
    %v753 = vpop.f32.mrb[0].mxu0
    %754 = vmatprep.mubr.f32.mxu0 0.0
    %v755 = vand.u32 %v213, 4294901760
    %756 = vmatmul.mubr.f32.gmra.mrb[0].mxu0 %v755
    %v757 = vpop.f32.mrb[0].mxu0
    %v758 = vadd.f32 %v481, %v757
    %v759 = vpop.f32.mrb[0].mxu0
    %760 = vmatprep.mubr.f32.mxu0 0.0
    %v761 = vand.u32 %v214, 4294901760
    %762 = vmatmul.mubr.f32.gmra.mrb[0].mxu0 %v761
    %v763 = vpop.f32.mrb[0].mxu0
    %v764 = vadd.f32 %v491, %v763
    %v765 = vpop.f32.mrb[0].mxu0
    %766 = vmatprep.mubr.f32.mxu0 0.0
    %v767 = vand.u32 %v215, 4294901760
    %768 = vmatmul.mubr.f32.gmra.mrb[0].mxu0 %v767
    %v769 = vpop.f32.mrb[0].mxu0
    %v770 = vadd.f32 %v501, %v769
    %v771 = vpop.f32.mrb[0].mxu0
    %772 = vmatprep.mubr.f32.mxu0 0.0
    %v773 = vand.u32 %v216, 4294901760
    %774 = vmatmul.mubr.f32.gmra.mrb[0].mxu0 %v773
    %v775 = vpop.f32.mrb[0].mxu0
    %v776 = vadd.f32 %v511, %v775
    %v777 = vpop.f32.mrb[0].mxu0
    %778 = vmatprep.mubr.f32.mxu0 0.0
    %v779 = vand.u32 %v217, 4294901760
    %780 = vmatmul.mubr.f32.gmra.mrb[0].mxu0 %v779
    %v781 = vpop.f32.mrb[0].mxu0
    %v782 = vadd.f32 %v521, %v781
    %v783 = vpop.f32.mrb[0].mxu0
    %784 = vmatprep.mubr.f32.mxu0 0.0
    %v785 = vand.u32 %v218, 4294901760
    %786 = vmatmul.mubr.f32.gmra.mrb[0].mxu0 %v785
    %v787 = vpop.f32.mrb[0].mxu0
    %v788 = vadd.f32 %v531, %v787
    %v789 = vpop.f32.mrb[0].mxu0
    %790 = vmatprep.mubr.f32.mxu0 0.0
    %v791 = vand.u32 %v219, 4294901760
    %792 = vmatmul.mubr.f32.gmra.mrb[0].mxu0 %v791
    %v793 = vpop.f32.mrb[0].mxu0
    %v794 = vadd.f32 %v541, %v793
    %v795 = vpop.f32.mrb[0].mxu0
    %796 = vmatprep.mubr.f32.mxu0 0.0
    %v797 = vand.u32 %v220, 4294901760
    %798 = vmatmul.mubr.f32.gmra.mrb[0].mxu0 %v797
    %v799 = vpop.f32.mrb[0].mxu0
    %v800 = vadd.f32 %v551, %v799
    %v801 = vpop.f32.mrb[0].mxu0
    %802 = vmatprep.mubr.f32.mxu0 0.0
    %v803 = vand.u32 %v221, 4294901760
    %804 = vmatmul.mubr.f32.gmra.mrb[0].mxu0 %v803
    %v805 = vpop.f32.mrb[0].mxu0
    %v806 = vadd.f32 %v561, %v805
    %v807 = vpop.f32.mrb[0].mxu0
    %808 = vmatprep.mubr.f32.mxu0 0.0
    %v809 = vand.u32 %v222, 4294901760
    %810 = vmatmul.mubr.f32.gmra.mrb[0].mxu0 %v809
    %v811 = vpop.f32.mrb[0].mxu0
    %v812 = vadd.f32 %v571, %v811
    %v813 = vpop.f32.mrb[0].mxu0
    %814 = vdwg.mxu0
    %815 = vmatprep.subr.mxu0 0.0
    %v816 = vand.u32 %v309, 4294901760
    %v817 = vsub.f32 %v309, %v816
    %818 = vmatpush1.msra.mxu0 %v817
    %819 = vmatprep.subr.mxu0 0.0
    %v820 = vand.u32 %v310, 4294901760
    %v821 = vsub.f32 %v310, %v820
    %822 = vmatpush1.msra.mxu0 %v821
    %823 = vmatprep.subr.mxu0 0.0
    %v824 = vand.u32 %v311, 4294901760
    %v825 = vsub.f32 %v311, %v824
    %826 = vmatpush1.msra.mxu0 %v825
    %827 = vmatprep.subr.mxu0 0.0
    %v828 = vand.u32 %v312, 4294901760
    %v829 = vsub.f32 %v312, %v828
    %830 = vmatpush1.msra.mxu0 %v829
    %831 = vmatprep.subr.mxu0 0.0
    %v832 = vand.u32 %v313, 4294901760
    %v833 = vsub.f32 %v313, %v832
    %834 = vmatpush1.msra.mxu0 %v833
    %835 = vmatprep.subr.mxu0 0.0
    %v836 = vand.u32 %v314, 4294901760
    %v837 = vsub.f32 %v314, %v836
    %838 = vmatpush1.msra.mxu0 %v837
    %839 = vmatprep.subr.mxu0 0.0
    %v840 = vand.u32 %v315, 4294901760
    %v841 = vsub.f32 %v315, %v840
    %842 = vmatpush1.msra.mxu0 %v841
    %843 = vmatprep.subr.mxu0 0.0
    %v844 = vand.u32 %v316, 4294901760
    %v845 = vsub.f32 %v316, %v844
    %846 = vmatpush1.msra.mxu0 %v845
    %847 = vmatprep.subr.mxu0 0.0
    %v848 = vand.u32 %v317, 4294901760
    %v849 = vsub.f32 %v317, %v848
    %850 = vmatpush1.msra.mxu0 %v849
    %851 = vmatprep.subr.mxu0 0.0
    %v852 = vand.u32 %v318, 4294901760
    %v853 = vsub.f32 %v318, %v852
    %854 = vmatpush1.msra.mxu0 %v853
    %855 = vmatprep.subr.mxu0 0.0
    %v856 = vand.u32 %v319, 4294901760
    %v857 = vsub.f32 %v319, %v856
    %858 = vmatpush1.msra.mxu0 %v857
    %859 = vmatprep.subr.mxu0 0.0
    %v860 = vand.u32 %v320, 4294901760
    %v861 = vsub.f32 %v320, %v860
    %862 = vmatpush1.msra.mxu0 %v861
    %863 = vmatprep.subr.mxu0 0.0
    %v864 = vand.u32 %v321, 4294901760
    %v865 = vsub.f32 %v321, %v864
    %866 = vmatpush1.msra.mxu0 %v865
    %867 = vmatprep.subr.mxu0 0.0
    %v868 = vand.u32 %v322, 4294901760
    %v869 = vsub.f32 %v322, %v868
    %870 = vmatpush1.msra.mxu0 %v869
    %871 = vmatprep.subr.mxu0 0.0
    %v872 = vand.u32 %v323, 4294901760
    %v873 = vsub.f32 %v323, %v872
    %874 = vmatpush1.msra.mxu0 %v873
    %875 = vmatprep.subr.mxu0 0.0
    %v876 = vand.u32 %v324, 4294901760
    %v877 = vsub.f32 %v324, %v876
    %878 = vmatpush1.msra.mxu0 %v877
    %879 = vmatprep.subr.mxu0 0.0
    %880 = vmatpush1.msra.mxu0 0.0
    %881 = vmatprep.subr.mxu0 0.0
    %882 = vmatpush1.msra.mxu0 0.0
    %883 = vmatprep.subr.mxu0 0.0
    %884 = vmatpush1.msra.mxu0 0.0
    %885 = vmatprep.subr.mxu0 0.0
    %886 = vmatpush1.msra.mxu0 0.0
    %887 = vmatprep.subr.mxu0 0.0
    %888 = vmatpush1.msra.mxu0 0.0
    %889 = vmatprep.subr.mxu0 0.0
    %890 = vmatpush1.msra.mxu0 0.0
    %891 = vmatprep.subr.mxu0 0.0
    %892 = vmatpush1.msra.mxu0 0.0
    %893 = vmatprep.subr.mxu0 0.0
    %894 = vmatpush1.msra.mxu0 0.0
    %895 = vmatprep.subr.mxu0 0.0
    %896 = vmatpush1.msra.mxu0 0.0
    %897 = vmatprep.subr.mxu0 0.0
    %898 = vmatpush1.msra.mxu0 0.0
    %899 = vmatprep.subr.mxu0 0.0
    %900 = vmatpush1.msra.mxu0 0.0
    %901 = vmatprep.subr.mxu0 0.0
    %902 = vmatpush1.msra.mxu0 0.0
    %903 = vmatprep.subr.mxu0 0.0
    %904 = vmatpush1.msra.mxu0 0.0
    %905 = vmatprep.subr.mxu0 0.0
    %906 = vmatpush1.msra.mxu0 0.0
    %907 = vmatprep.subr.mxu0 0.0
    %908 = vmatpush1.msra.mxu0 0.0
    %909 = vmatprep.subr.mxu0 0.0
    %910 = vmatpush1.msra.mxu0 0.0
    %911 = vmatprep.mubr.f32.mxu0 0.0
    %v912 = vand.u32 %v207, 4294901760
    %v913 = vsub.f32 %v207, %v912
    %914 = vmatmul.mubr.f32.gmra.mrb[0].mxu0 %v913
    %v915 = vpop.f32.mrb[0].mxu0
    %v916 = vadd.f32 %v722, %v915
    %v917 = vpop.f32.mrb[0].mxu0
    %918 = vmatprep.mubr.f32.mxu0 0.0
    %v919 = vand.u32 %v208, 4294901760
    %v920 = vsub.f32 %v208, %v919
    %921 = vmatmul.mubr.f32.gmra.mrb[0].mxu0 %v920
    %v922 = vpop.f32.mrb[0].mxu0
    %v923 = vadd.f32 %v728, %v922
    %v924 = vpop.f32.mrb[0].mxu0
    %925 = vmatprep.mubr.f32.mxu0 0.0
    %v926 = vand.u32 %v209, 4294901760
    %v927 = vsub.f32 %v209, %v926
    %928 = vmatmul.mubr.f32.gmra.mrb[0].mxu0 %v927
    %v929 = vpop.f32.mrb[0].mxu0
    %v930 = vadd.f32 %v734, %v929
    %v931 = vpop.f32.mrb[0].mxu0
    %932 = vmatprep.mubr.f32.mxu0 0.0
    %v933 = vand.u32 %v210, 4294901760
    %v934 = vsub.f32 %v210, %v933
    %935 = vmatmul.mubr.f32.gmra.mrb[0].mxu0 %v934
    %v936 = vpop.f32.mrb[0].mxu0
    %v937 = vadd.f32 %v740, %v936
    %v938 = vpop.f32.mrb[0].mxu0
    %939 = vmatprep.mubr.f32.mxu0 0.0
    %v940 = vand.u32 %v211, 4294901760
    %v941 = vsub.f32 %v211, %v940
    %942 = vmatmul.mubr.f32.gmra.mrb[0].mxu0 %v941
    %v943 = vpop.f32.mrb[0].mxu0
    %v944 = vadd.f32 %v746, %v943
    %v945 = vpop.f32.mrb[0].mxu0
    %946 = vmatprep.mubr.f32.mxu0 0.0
    %v947 = vand.u32 %v212, 4294901760
    %v948 = vsub.f32 %v212, %v947
    %949 = vmatmul.mubr.f32.gmra.mrb[0].mxu0 %v948
    %v950 = vpop.f32.mrb[0].mxu0
    %v951 = vadd.f32 %v752, %v950
    %v952 = vpop.f32.mrb[0].mxu0
    %953 = vmatprep.mubr.f32.mxu0 0.0
    %v954 = vand.u32 %v213, 4294901760
    %v955 = vsub.f32 %v213, %v954
    %956 = vmatmul.mubr.f32.gmra.mrb[0].mxu0 %v955
    %v957 = vpop.f32.mrb[0].mxu0
    %v958 = vadd.f32 %v758, %v957
    %v959 = vpop.f32.mrb[0].mxu0
    %960 = vmatprep.mubr.f32.mxu0 0.0
    %v961 = vand.u32 %v214, 4294901760
    %v962 = vsub.f32 %v214, %v961
    %963 = vmatmul.mubr.f32.gmra.mrb[0].mxu0 %v962
    %v964 = vpop.f32.mrb[0].mxu0
    %v965 = vadd.f32 %v764, %v964
    %v966 = vpop.f32.mrb[0].mxu0
    %967 = vmatprep.mubr.f32.mxu0 0.0
    %v968 = vand.u32 %v215, 4294901760
    %v969 = vsub.f32 %v215, %v968
    %970 = vmatmul.mubr.f32.gmra.mrb[0].mxu0 %v969
    %v971 = vpop.f32.mrb[0].mxu0
    %v972 = vadd.f32 %v770, %v971
    %v973 = vpop.f32.mrb[0].mxu0
    %974 = vmatprep.mubr.f32.mxu0 0.0
    %v975 = vand.u32 %v216, 4294901760
    %v976 = vsub.f32 %v216, %v975
    %977 = vmatmul.mubr.f32.gmra.mrb[0].mxu0 %v976
    %v978 = vpop.f32.mrb[0].mxu0
    %v979 = vadd.f32 %v776, %v978
    %v980 = vpop.f32.mrb[0].mxu0
    %981 = vmatprep.mubr.f32.mxu0 0.0
    %v982 = vand.u32 %v217, 4294901760
    %v983 = vsub.f32 %v217, %v982
    %984 = vmatmul.mubr.f32.gmra.mrb[0].mxu0 %v983
    %v985 = vpop.f32.mrb[0].mxu0
    %v986 = vadd.f32 %v782, %v985
    %v987 = vpop.f32.mrb[0].mxu0
    %988 = vmatprep.mubr.f32.mxu0 0.0
    %v989 = vand.u32 %v218, 4294901760
    %v990 = vsub.f32 %v218, %v989
    %991 = vmatmul.mubr.f32.gmra.mrb[0].mxu0 %v990
    %v992 = vpop.f32.mrb[0].mxu0
    %v993 = vadd.f32 %v788, %v992
    %v994 = vpop.f32.mrb[0].mxu0
    %995 = vmatprep.mubr.f32.mxu0 0.0
    %v996 = vand.u32 %v219, 4294901760
    %v997 = vsub.f32 %v219, %v996
    %998 = vmatmul.mubr.f32.gmra.mrb[0].mxu0 %v997
    %v999 = vpop.f32.mrb[0].mxu0
    %v1000 = vadd.f32 %v794, %v999
    %v1001 = vpop.f32.mrb[0].mxu0
    %1002 = vmatprep.mubr.f32.mxu0 0.0
    %v1003 = vand.u32 %v220, 4294901760
    %v1004 = vsub.f32 %v220, %v1003
    %1005 = vmatmul.mubr.f32.gmra.mrb[0].mxu0 %v1004
    %v1006 = vpop.f32.mrb[0].mxu0
    %v1007 = vadd.f32 %v800, %v1006
    %v1008 = vpop.f32.mrb[0].mxu0
    %1009 = vmatprep.mubr.f32.mxu0 0.0
    %v1010 = vand.u32 %v221, 4294901760
    %v1011 = vsub.f32 %v221, %v1010
    %1012 = vmatmul.mubr.f32.gmra.mrb[0].mxu0 %v1011
    %v1013 = vpop.f32.mrb[0].mxu0
    %v1014 = vadd.f32 %v806, %v1013
    %v1015 = vpop.f32.mrb[0].mxu0
    %1016 = vmatprep.mubr.f32.mxu0 0.0
    %v1017 = vand.u32 %v222, 4294901760
    %v1018 = vsub.f32 %v222, %v1017
    %1019 = vmatmul.mubr.f32.gmra.mrb[0].mxu0 %v1018
    %v1020 = vpop.f32.mrb[0].mxu0
    %v1021 = vadd.f32 %v812, %v1020
    %v1022 = vpop.f32.mrb[0].mxu0
    %1023 = vdwg.mxu0
    %1024 = vmatprep.subr.mxu0 0.0
    %v1025 = vand.u32 %v309, 4294901760
    %1026 = vmatpush1.msra.mxu0 %v1025
    %1027 = vmatprep.subr.mxu0 0.0
    %v1028 = vand.u32 %v310, 4294901760
    %1029 = vmatpush1.msra.mxu0 %v1028
    %1030 = vmatprep.subr.mxu0 0.0
    %v1031 = vand.u32 %v311, 4294901760
    %1032 = vmatpush1.msra.mxu0 %v1031
    %1033 = vmatprep.subr.mxu0 0.0
    %v1034 = vand.u32 %v312, 4294901760
    %1035 = vmatpush1.msra.mxu0 %v1034
    %1036 = vmatprep.subr.mxu0 0.0
    %v1037 = vand.u32 %v313, 4294901760
    %1038 = vmatpush1.msra.mxu0 %v1037
    %1039 = vmatprep.subr.mxu0 0.0
    %v1040 = vand.u32 %v314, 4294901760
    %1041 = vmatpush1.msra.mxu0 %v1040
    %1042 = vmatprep.subr.mxu0 0.0
    %v1043 = vand.u32 %v315, 4294901760
    %1044 = vmatpush1.msra.mxu0 %v1043
    %1045 = vmatprep.subr.mxu0 0.0
    %v1046 = vand.u32 %v316, 4294901760
    %1047 = vmatpush1.msra.mxu0 %v1046
    %1048 = vmatprep.subr.mxu0 0.0
    %v1049 = vand.u32 %v317, 4294901760
    %1050 = vmatpush1.msra.mxu0 %v1049
    %1051 = vmatprep.subr.mxu0 0.0
    %v1052 = vand.u32 %v318, 4294901760
    %1053 = vmatpush1.msra.mxu0 %v1052
    %1054 = vmatprep.subr.mxu0 0.0
    %v1055 = vand.u32 %v319, 4294901760
    %1056 = vmatpush1.msra.mxu0 %v1055
    %1057 = vmatprep.subr.mxu0 0.0
    %v1058 = vand.u32 %v320, 4294901760
    %1059 = vmatpush1.msra.mxu0 %v1058
    %1060 = vmatprep.subr.mxu0 0.0
    %v1061 = vand.u32 %v321, 4294901760
    %1062 = vmatpush1.msra.mxu0 %v1061
    %1063 = vmatprep.subr.mxu0 0.0
    %v1064 = vand.u32 %v322, 4294901760
    %1065 = vmatpush1.msra.mxu0 %v1064
    %1066 = vmatprep.subr.mxu0 0.0
    %v1067 = vand.u32 %v323, 4294901760
    %1068 = vmatpush1.msra.mxu0 %v1067
    %1069 = vmatprep.subr.mxu0 0.0
    %v1070 = vand.u32 %v324, 4294901760
    %1071 = vmatpush1.msra.mxu0 %v1070
    %1072 = vmatprep.subr.mxu0 0.0
    %1073 = vmatpush1.msra.mxu0 0.0
    %1074 = vmatprep.subr.mxu0 0.0
    %1075 = vmatpush1.msra.mxu0 0.0
    %1076 = vmatprep.subr.mxu0 0.0
    %1077 = vmatpush1.msra.mxu0 0.0
    %1078 = vmatprep.subr.mxu0 0.0
    %1079 = vmatpush1.msra.mxu0 0.0
    %1080 = vmatprep.subr.mxu0 0.0
    %1081 = vmatpush1.msra.mxu0 0.0
    %1082 = vmatprep.subr.mxu0 0.0
    %1083 = vmatpush1.msra.mxu0 0.0
    %1084 = vmatprep.subr.mxu0 0.0
    %1085 = vmatpush1.msra.mxu0 0.0
    %1086 = vmatprep.subr.mxu0 0.0
    %1087 = vmatpush1.msra.mxu0 0.0
    %1088 = vmatprep.subr.mxu0 0.0
    %1089 = vmatpush1.msra.mxu0 0.0
    %1090 = vmatprep.subr.mxu0 0.0
    %1091 = vmatpush1.msra.mxu0 0.0
    %1092 = vmatprep.subr.mxu0 0.0
    %1093 = vmatpush1.msra.mxu0 0.0
    %1094 = vmatprep.subr.mxu0 0.0
    %1095 = vmatpush1.msra.mxu0 0.0
    %1096 = vmatprep.subr.mxu0 0.0
    %1097 = vmatpush1.msra.mxu0 0.0
    %1098 = vmatprep.subr.mxu0 0.0
    %1099 = vmatpush1.msra.mxu0 0.0
    %1100 = vmatprep.subr.mxu0 0.0
    %1101 = vmatpush1.msra.mxu0 0.0
    %1102 = vmatprep.subr.mxu0 0.0
    %1103 = vmatpush1.msra.mxu0 0.0
    %1104 = vmatprep.mubr.f32.mxu0 0.0
    %v1105 = vand.u32 %v207, 4294901760
    %v1106 = vsub.f32 %v207, %v1105
    %v1107 = vand.u32 %v1106, 4294901760
    %1108 = vmatmul.mubr.f32.gmra.mrb[0].mxu0 %v1107
    %v1109 = vpop.f32.mrb[0].mxu0
    %v1110 = vadd.f32 %v916, %v1109
    %v1111 = vpop.f32.mrb[0].mxu0
    %1112 = vmatprep.mubr.f32.mxu0 0.0
    %v1113 = vand.u32 %v208, 4294901760
    %v1114 = vsub.f32 %v208, %v1113
    %v1115 = vand.u32 %v1114, 4294901760
    %1116 = vmatmul.mubr.f32.gmra.mrb[0].mxu0 %v1115
    %v1117 = vpop.f32.mrb[0].mxu0
    %v1118 = vadd.f32 %v923, %v1117
    %v1119 = vpop.f32.mrb[0].mxu0
    %1120 = vmatprep.mubr.f32.mxu0 0.0
    %v1121 = vand.u32 %v209, 4294901760
    %v1122 = vsub.f32 %v209, %v1121
    %v1123 = vand.u32 %v1122, 4294901760
    %1124 = vmatmul.mubr.f32.gmra.mrb[0].mxu0 %v1123
    %v1125 = vpop.f32.mrb[0].mxu0
    %v1126 = vadd.f32 %v930, %v1125
    %v1127 = vpop.f32.mrb[0].mxu0
    %1128 = vmatprep.mubr.f32.mxu0 0.0
    %v1129 = vand.u32 %v210, 4294901760
    %v1130 = vsub.f32 %v210, %v1129
    %v1131 = vand.u32 %v1130, 4294901760
    %1132 = vmatmul.mubr.f32.gmra.mrb[0].mxu0 %v1131
    %v1133 = vpop.f32.mrb[0].mxu0
    %v1134 = vadd.f32 %v937, %v1133
    %v1135 = vpop.f32.mrb[0].mxu0
    %1136 = vmatprep.mubr.f32.mxu0 0.0
    %v1137 = vand.u32 %v211, 4294901760
    %v1138 = vsub.f32 %v211, %v1137
    %v1139 = vand.u32 %v1138, 4294901760
    %1140 = vmatmul.mubr.f32.gmra.mrb[0].mxu0 %v1139
    %v1141 = vpop.f32.mrb[0].mxu0
    %v1142 = vadd.f32 %v944, %v1141
    %v1143 = vpop.f32.mrb[0].mxu0
    %1144 = vmatprep.mubr.f32.mxu0 0.0
    %v1145 = vand.u32 %v212, 4294901760
    %v1146 = vsub.f32 %v212, %v1145
    %v1147 = vand.u32 %v1146, 4294901760
    %1148 = vmatmul.mubr.f32.gmra.mrb[0].mxu0 %v1147
    %v1149 = vpop.f32.mrb[0].mxu0
    %v1150 = vadd.f32 %v951, %v1149
    %v1151 = vpop.f32.mrb[0].mxu0
    %1152 = vmatprep.mubr.f32.mxu0 0.0
    %v1153 = vand.u32 %v213, 4294901760
    %v1154 = vsub.f32 %v213, %v1153
    %v1155 = vand.u32 %v1154, 4294901760
    %1156 = vmatmul.mubr.f32.gmra.mrb[0].mxu0 %v1155
    %v1157 = vpop.f32.mrb[0].mxu0
    %v1158 = vadd.f32 %v958, %v1157
    %v1159 = vpop.f32.mrb[0].mxu0
    %1160 = vmatprep.mubr.f32.mxu0 0.0
    %v1161 = vand.u32 %v214, 4294901760
    %v1162 = vsub.f32 %v214, %v1161
    %v1163 = vand.u32 %v1162, 4294901760
    %1164 = vmatmul.mubr.f32.gmra.mrb[0].mxu0 %v1163
    %v1165 = vpop.f32.mrb[0].mxu0
    %v1166 = vadd.f32 %v965, %v1165
    %v1167 = vpop.f32.mrb[0].mxu0
    %1168 = vmatprep.mubr.f32.mxu0 0.0
    %v1169 = vand.u32 %v215, 4294901760
    %v1170 = vsub.f32 %v215, %v1169
    %v1171 = vand.u32 %v1170, 4294901760
    %1172 = vmatmul.mubr.f32.gmra.mrb[0].mxu0 %v1171
    %v1173 = vpop.f32.mrb[0].mxu0
    %v1174 = vadd.f32 %v972, %v1173
    %v1175 = vpop.f32.mrb[0].mxu0
    %1176 = vmatprep.mubr.f32.mxu0 0.0
    %v1177 = vand.u32 %v216, 4294901760
    %v1178 = vsub.f32 %v216, %v1177
    %v1179 = vand.u32 %v1178, 4294901760
    %1180 = vmatmul.mubr.f32.gmra.mrb[0].mxu0 %v1179
    %v1181 = vpop.f32.mrb[0].mxu0
    %v1182 = vadd.f32 %v979, %v1181
    %v1183 = vpop.f32.mrb[0].mxu0
    %1184 = vmatprep.mubr.f32.mxu0 0.0
    %v1185 = vand.u32 %v217, 4294901760
    %v1186 = vsub.f32 %v217, %v1185
    %v1187 = vand.u32 %v1186, 4294901760
    %1188 = vmatmul.mubr.f32.gmra.mrb[0].mxu0 %v1187
    %v1189 = vpop.f32.mrb[0].mxu0
    %v1190 = vadd.f32 %v986, %v1189
    %v1191 = vpop.f32.mrb[0].mxu0
    %1192 = vmatprep.mubr.f32.mxu0 0.0
    %v1193 = vand.u32 %v218, 4294901760
    %v1194 = vsub.f32 %v218, %v1193
    %v1195 = vand.u32 %v1194, 4294901760
    %1196 = vmatmul.mubr.f32.gmra.mrb[0].mxu0 %v1195
    %v1197 = vpop.f32.mrb[0].mxu0
    %v1198 = vadd.f32 %v993, %v1197
    %v1199 = vpop.f32.mrb[0].mxu0
    %1200 = vmatprep.mubr.f32.mxu0 0.0
    %v1201 = vand.u32 %v219, 4294901760
    %v1202 = vsub.f32 %v219, %v1201
    %v1203 = vand.u32 %v1202, 4294901760
    %1204 = vmatmul.mubr.f32.gmra.mrb[0].mxu0 %v1203
    %v1205 = vpop.f32.mrb[0].mxu0
    %v1206 = vadd.f32 %v1000, %v1205
    %v1207 = vpop.f32.mrb[0].mxu0
    %1208 = vmatprep.mubr.f32.mxu0 0.0
    %v1209 = vand.u32 %v220, 4294901760
    %v1210 = vsub.f32 %v220, %v1209
    %v1211 = vand.u32 %v1210, 4294901760
    %1212 = vmatmul.mubr.f32.gmra.mrb[0].mxu0 %v1211
    %v1213 = vpop.f32.mrb[0].mxu0
    %v1214 = vadd.f32 %v1007, %v1213
    %v1215 = vpop.f32.mrb[0].mxu0
    %1216 = vmatprep.mubr.f32.mxu0 0.0
    %v1217 = vand.u32 %v221, 4294901760
    %v1218 = vsub.f32 %v221, %v1217
    %v1219 = vand.u32 %v1218, 4294901760
    %1220 = vmatmul.mubr.f32.gmra.mrb[0].mxu0 %v1219
    %v1221 = vpop.f32.mrb[0].mxu0
    %v1222 = vadd.f32 %v1014, %v1221
    %v1223 = vpop.f32.mrb[0].mxu0
    %1224 = vmatprep.mubr.f32.mxu0 0.0
    %v1225 = vand.u32 %v222, 4294901760
    %v1226 = vsub.f32 %v222, %v1225
    %v1227 = vand.u32 %v1226, 4294901760
    %1228 = vmatmul.mubr.f32.gmra.mrb[0].mxu0 %v1227
    %v1229 = vpop.f32.mrb[0].mxu0
    %v1230 = vadd.f32 %v1021, %v1229
    %v1231 = vpop.f32.mrb[0].mxu0
    %1232 = vdwg.mxu0
    %1233 = vmatprep.subr.mxu0 0.0
    %v1234 = vand.u32 %v309, 4294901760
    %v1235 = vsub.f32 %v309, %v1234
    %v1236 = vand.u32 %v1235, 4294901760
    %1237 = vmatpush1.msra.mxu0 %v1236
    %1238 = vmatprep.subr.mxu0 0.0
    %v1239 = vand.u32 %v310, 4294901760
    %v1240 = vsub.f32 %v310, %v1239
    %v1241 = vand.u32 %v1240, 4294901760
    %1242 = vmatpush1.msra.mxu0 %v1241
    %1243 = vmatprep.subr.mxu0 0.0
    %v1244 = vand.u32 %v311, 4294901760
    %v1245 = vsub.f32 %v311, %v1244
    %v1246 = vand.u32 %v1245, 4294901760
    %1247 = vmatpush1.msra.mxu0 %v1246
    %1248 = vmatprep.subr.mxu0 0.0
    %v1249 = vand.u32 %v312, 4294901760
    %v1250 = vsub.f32 %v312, %v1249
    %v1251 = vand.u32 %v1250, 4294901760
    %1252 = vmatpush1.msra.mxu0 %v1251
    %1253 = vmatprep.subr.mxu0 0.0
    %v1254 = vand.u32 %v313, 4294901760
    %v1255 = vsub.f32 %v313, %v1254
    %v1256 = vand.u32 %v1255, 4294901760
    %1257 = vmatpush1.msra.mxu0 %v1256
    %1258 = vmatprep.subr.mxu0 0.0
    %v1259 = vand.u32 %v314, 4294901760
    %v1260 = vsub.f32 %v314, %v1259
    %v1261 = vand.u32 %v1260, 4294901760
    %1262 = vmatpush1.msra.mxu0 %v1261
    %1263 = vmatprep.subr.mxu0 0.0
    %v1264 = vand.u32 %v315, 4294901760
    %v1265 = vsub.f32 %v315, %v1264
    %v1266 = vand.u32 %v1265, 4294901760
    %1267 = vmatpush1.msra.mxu0 %v1266
    %1268 = vmatprep.subr.mxu0 0.0
    %v1269 = vand.u32 %v316, 4294901760
    %v1270 = vsub.f32 %v316, %v1269
    %v1271 = vand.u32 %v1270, 4294901760
    %1272 = vmatpush1.msra.mxu0 %v1271
    %1273 = vmatprep.subr.mxu0 0.0
    %v1274 = vand.u32 %v317, 4294901760
    %v1275 = vsub.f32 %v317, %v1274
    %v1276 = vand.u32 %v1275, 4294901760
    %1277 = vmatpush1.msra.mxu0 %v1276
    %1278 = vmatprep.subr.mxu0 0.0
    %v1279 = vand.u32 %v318, 4294901760
    %v1280 = vsub.f32 %v318, %v1279
    %v1281 = vand.u32 %v1280, 4294901760
    %1282 = vmatpush1.msra.mxu0 %v1281
    %1283 = vmatprep.subr.mxu0 0.0
    %v1284 = vand.u32 %v319, 4294901760
    %v1285 = vsub.f32 %v319, %v1284
    %v1286 = vand.u32 %v1285, 4294901760
    %1287 = vmatpush1.msra.mxu0 %v1286
    %1288 = vmatprep.subr.mxu0 0.0
    %v1289 = vand.u32 %v320, 4294901760
    %v1290 = vsub.f32 %v320, %v1289
    %v1291 = vand.u32 %v1290, 4294901760
    %1292 = vmatpush1.msra.mxu0 %v1291
    %1293 = vmatprep.subr.mxu0 0.0
    %v1294 = vand.u32 %v321, 4294901760
    %v1295 = vsub.f32 %v321, %v1294
    %v1296 = vand.u32 %v1295, 4294901760
    %1297 = vmatpush1.msra.mxu0 %v1296
    %1298 = vmatprep.subr.mxu0 0.0
    %v1299 = vand.u32 %v322, 4294901760
    %v1300 = vsub.f32 %v322, %v1299
    %v1301 = vand.u32 %v1300, 4294901760
    %1302 = vmatpush1.msra.mxu0 %v1301
    %1303 = vmatprep.subr.mxu0 0.0
    %v1304 = vand.u32 %v323, 4294901760
    %v1305 = vsub.f32 %v323, %v1304
    %v1306 = vand.u32 %v1305, 4294901760
    %1307 = vmatpush1.msra.mxu0 %v1306
    %1308 = vmatprep.subr.mxu0 0.0
    %v1309 = vand.u32 %v324, 4294901760
    %v1310 = vsub.f32 %v324, %v1309
    %v1311 = vand.u32 %v1310, 4294901760
    %1312 = vmatpush1.msra.mxu0 %v1311
    %1313 = vmatprep.subr.mxu0 0.0
    %1314 = vmatpush1.msra.mxu0 0.0
    %1315 = vmatprep.subr.mxu0 0.0
    %1316 = vmatpush1.msra.mxu0 0.0
    %1317 = vmatprep.subr.mxu0 0.0
    %1318 = vmatpush1.msra.mxu0 0.0
    %1319 = vmatprep.subr.mxu0 0.0
    %1320 = vmatpush1.msra.mxu0 0.0
    %1321 = vmatprep.subr.mxu0 0.0
    %1322 = vmatpush1.msra.mxu0 0.0
    %1323 = vmatprep.subr.mxu0 0.0
    %1324 = vmatpush1.msra.mxu0 0.0
    %1325 = vmatprep.subr.mxu0 0.0
    %1326 = vmatpush1.msra.mxu0 0.0
    %1327 = vmatprep.subr.mxu0 0.0
    %1328 = vmatpush1.msra.mxu0 0.0
    %1329 = vmatprep.subr.mxu0 0.0
    %1330 = vmatpush1.msra.mxu0 0.0
    %1331 = vmatprep.subr.mxu0 0.0
    %1332 = vmatpush1.msra.mxu0 0.0
    %1333 = vmatprep.subr.mxu0 0.0
    %1334 = vmatpush1.msra.mxu0 0.0
    %1335 = vmatprep.subr.mxu0 0.0
    %1336 = vmatpush1.msra.mxu0 0.0
    %1337 = vmatprep.subr.mxu0 0.0
    %1338 = vmatpush1.msra.mxu0 0.0
    %1339 = vmatprep.subr.mxu0 0.0
    %1340 = vmatpush1.msra.mxu0 0.0
    %1341 = vmatprep.subr.mxu0 0.0
    %1342 = vmatpush1.msra.mxu0 0.0
    %1343 = vmatprep.subr.mxu0 0.0
    %1344 = vmatpush1.msra.mxu0 0.0
    %1345 = vmatprep.mubr.f32.mxu0 0.0
    %v1346 = vand.u32 %v207, 4294901760
    %1347 = vmatmul.mubr.f32.gmra.mrb[0].mxu0 %v1346
    %v1348 = vpop.f32.mrb[0].mxu0
    %v1349 = vadd.f32 %v1110, %v1348
    %v1350 = vpop.f32.mrb[0].mxu0
    %1351 = vmatprep.mubr.f32.mxu0 0.0
    %v1352 = vand.u32 %v208, 4294901760
    %1353 = vmatmul.mubr.f32.gmra.mrb[0].mxu0 %v1352
    %v1354 = vpop.f32.mrb[0].mxu0
    %v1355 = vadd.f32 %v1118, %v1354
    %v1356 = vpop.f32.mrb[0].mxu0
    %1357 = vmatprep.mubr.f32.mxu0 0.0
    %v1358 = vand.u32 %v209, 4294901760
    %1359 = vmatmul.mubr.f32.gmra.mrb[0].mxu0 %v1358
    %v1360 = vpop.f32.mrb[0].mxu0
    %v1361 = vadd.f32 %v1126, %v1360
    %v1362 = vpop.f32.mrb[0].mxu0
    %1363 = vmatprep.mubr.f32.mxu0 0.0
    %v1364 = vand.u32 %v210, 4294901760
    %1365 = vmatmul.mubr.f32.gmra.mrb[0].mxu0 %v1364
    %v1366 = vpop.f32.mrb[0].mxu0
    %v1367 = vadd.f32 %v1134, %v1366
    %v1368 = vpop.f32.mrb[0].mxu0
    %1369 = vmatprep.mubr.f32.mxu0 0.0
    %v1370 = vand.u32 %v211, 4294901760
    %1371 = vmatmul.mubr.f32.gmra.mrb[0].mxu0 %v1370
    %v1372 = vpop.f32.mrb[0].mxu0
    %v1373 = vadd.f32 %v1142, %v1372
    %v1374 = vpop.f32.mrb[0].mxu0
    %1375 = vmatprep.mubr.f32.mxu0 0.0
    %v1376 = vand.u32 %v212, 4294901760
    %1377 = vmatmul.mubr.f32.gmra.mrb[0].mxu0 %v1376
    %v1378 = vpop.f32.mrb[0].mxu0
    %v1379 = vadd.f32 %v1150, %v1378
    %v1380 = vpop.f32.mrb[0].mxu0
    %1381 = vmatprep.mubr.f32.mxu0 0.0
    %v1382 = vand.u32 %v213, 4294901760
    %1383 = vmatmul.mubr.f32.gmra.mrb[0].mxu0 %v1382
    %v1384 = vpop.f32.mrb[0].mxu0
    %v1385 = vadd.f32 %v1158, %v1384
    %v1386 = vpop.f32.mrb[0].mxu0
    %1387 = vmatprep.mubr.f32.mxu0 0.0
    %v1388 = vand.u32 %v214, 4294901760
    %1389 = vmatmul.mubr.f32.gmra.mrb[0].mxu0 %v1388
    %v1390 = vpop.f32.mrb[0].mxu0
    %v1391 = vadd.f32 %v1166, %v1390
    %v1392 = vpop.f32.mrb[0].mxu0
    %1393 = vmatprep.mubr.f32.mxu0 0.0
    %v1394 = vand.u32 %v215, 4294901760
    %1395 = vmatmul.mubr.f32.gmra.mrb[0].mxu0 %v1394
    %v1396 = vpop.f32.mrb[0].mxu0
    %v1397 = vadd.f32 %v1174, %v1396
    %v1398 = vpop.f32.mrb[0].mxu0
    %1399 = vmatprep.mubr.f32.mxu0 0.0
    %v1400 = vand.u32 %v216, 4294901760
    %1401 = vmatmul.mubr.f32.gmra.mrb[0].mxu0 %v1400
    %v1402 = vpop.f32.mrb[0].mxu0
    %v1403 = vadd.f32 %v1182, %v1402
    %v1404 = vpop.f32.mrb[0].mxu0
    %1405 = vmatprep.mubr.f32.mxu0 0.0
    %v1406 = vand.u32 %v217, 4294901760
    %1407 = vmatmul.mubr.f32.gmra.mrb[0].mxu0 %v1406
    %v1408 = vpop.f32.mrb[0].mxu0
    %v1409 = vadd.f32 %v1190, %v1408
    %v1410 = vpop.f32.mrb[0].mxu0
    %1411 = vmatprep.mubr.f32.mxu0 0.0
    %v1412 = vand.u32 %v218, 4294901760
    %1413 = vmatmul.mubr.f32.gmra.mrb[0].mxu0 %v1412
    %v1414 = vpop.f32.mrb[0].mxu0
    %v1415 = vadd.f32 %v1198, %v1414
    %v1416 = vpop.f32.mrb[0].mxu0
    %1417 = vmatprep.mubr.f32.mxu0 0.0
    %v1418 = vand.u32 %v219, 4294901760
    %1419 = vmatmul.mubr.f32.gmra.mrb[0].mxu0 %v1418
    %v1420 = vpop.f32.mrb[0].mxu0
    %v1421 = vadd.f32 %v1206, %v1420
    %v1422 = vpop.f32.mrb[0].mxu0
    %1423 = vmatprep.mubr.f32.mxu0 0.0
    %v1424 = vand.u32 %v220, 4294901760
    %1425 = vmatmul.mubr.f32.gmra.mrb[0].mxu0 %v1424
    %v1426 = vpop.f32.mrb[0].mxu0
    %v1427 = vadd.f32 %v1214, %v1426
    %v1428 = vpop.f32.mrb[0].mxu0
    %1429 = vmatprep.mubr.f32.mxu0 0.0
    %v1430 = vand.u32 %v221, 4294901760
    %1431 = vmatmul.mubr.f32.gmra.mrb[0].mxu0 %v1430
    %v1432 = vpop.f32.mrb[0].mxu0
    %v1433 = vadd.f32 %v1222, %v1432
    %v1434 = vpop.f32.mrb[0].mxu0
    %1435 = vmatprep.mubr.f32.mxu0 0.0
    %v1436 = vand.u32 %v222, 4294901760
    %1437 = vmatmul.mubr.f32.gmra.mrb[0].mxu0 %v1436
    %v1438 = vpop.f32.mrb[0].mxu0
    %v1439 = vadd.f32 %v1230, %v1438
    %v1440 = vpop.f32.mrb[0].mxu0
    %1441 = vdwg.mxu0
    %1442 = vmatprep.subr.mxu0 0.0
    %v1443 = vand.u32 %v309, 4294901760
    %1444 = vmatpush1.msra.mxu0 %v1443
    %1445 = vmatprep.subr.mxu0 0.0
    %v1446 = vand.u32 %v310, 4294901760
    %1447 = vmatpush1.msra.mxu0 %v1446
    %1448 = vmatprep.subr.mxu0 0.0
    %v1449 = vand.u32 %v311, 4294901760
    %1450 = vmatpush1.msra.mxu0 %v1449
    %1451 = vmatprep.subr.mxu0 0.0
    %v1452 = vand.u32 %v312, 4294901760
    %1453 = vmatpush1.msra.mxu0 %v1452
    %1454 = vmatprep.subr.mxu0 0.0
    %v1455 = vand.u32 %v313, 4294901760
    %1456 = vmatpush1.msra.mxu0 %v1455
    %1457 = vmatprep.subr.mxu0 0.0
    %v1458 = vand.u32 %v314, 4294901760
    %1459 = vmatpush1.msra.mxu0 %v1458
    %1460 = vmatprep.subr.mxu0 0.0
    %v1461 = vand.u32 %v315, 4294901760
    %1462 = vmatpush1.msra.mxu0 %v1461
    %1463 = vmatprep.subr.mxu0 0.0
    %v1464 = vand.u32 %v316, 4294901760
    %1465 = vmatpush1.msra.mxu0 %v1464
    %1466 = vmatprep.subr.mxu0 0.0
    %v1467 = vand.u32 %v317, 4294901760
    %1468 = vmatpush1.msra.mxu0 %v1467
    %1469 = vmatprep.subr.mxu0 0.0
    %v1470 = vand.u32 %v318, 4294901760
    %1471 = vmatpush1.msra.mxu0 %v1470
    %1472 = vmatprep.subr.mxu0 0.0
    %v1473 = vand.u32 %v319, 4294901760
    %1474 = vmatpush1.msra.mxu0 %v1473
    %1475 = vmatprep.subr.mxu0 0.0
    %v1476 = vand.u32 %v320, 4294901760
    %1477 = vmatpush1.msra.mxu0 %v1476
    %1478 = vmatprep.subr.mxu0 0.0
    %v1479 = vand.u32 %v321, 4294901760
    %1480 = vmatpush1.msra.mxu0 %v1479
    %1481 = vmatprep.subr.mxu0 0.0
    %v1482 = vand.u32 %v322, 4294901760
    %1483 = vmatpush1.msra.mxu0 %v1482
    %1484 = vmatprep.subr.mxu0 0.0
    %v1485 = vand.u32 %v323, 4294901760
    %1486 = vmatpush1.msra.mxu0 %v1485
    %1487 = vmatprep.subr.mxu0 0.0
    %v1488 = vand.u32 %v324, 4294901760
    %1489 = vmatpush1.msra.mxu0 %v1488
    %1490 = vmatprep.subr.mxu0 0.0
    %1491 = vmatpush1.msra.mxu0 0.0
    %1492 = vmatprep.subr.mxu0 0.0
    %1493 = vmatpush1.msra.mxu0 0.0
    %1494 = vmatprep.subr.mxu0 0.0
    %1495 = vmatpush1.msra.mxu0 0.0
    %1496 = vmatprep.subr.mxu0 0.0
    %1497 = vmatpush1.msra.mxu0 0.0
    %1498 = vmatprep.subr.mxu0 0.0
    %1499 = vmatpush1.msra.mxu0 0.0
    %1500 = vmatprep.subr.mxu0 0.0
    %1501 = vmatpush1.msra.mxu0 0.0
    %1502 = vmatprep.subr.mxu0 0.0
    %1503 = vmatpush1.msra.mxu0 0.0
    %1504 = vmatprep.subr.mxu0 0.0
    %1505 = vmatpush1.msra.mxu0 0.0
    %1506 = vmatprep.subr.mxu0 0.0
    %1507 = vmatpush1.msra.mxu0 0.0
    %1508 = vmatprep.subr.mxu0 0.0
    %1509 = vmatpush1.msra.mxu0 0.0
    %1510 = vmatprep.subr.mxu0 0.0
    %1511 = vmatpush1.msra.mxu0 0.0
    %1512 = vmatprep.subr.mxu0 0.0
    %1513 = vmatpush1.msra.mxu0 0.0
    %1514 = vmatprep.subr.mxu0 0.0
    %1515 = vmatpush1.msra.mxu0 0.0
    %1516 = vmatprep.subr.mxu0 0.0
    %1517 = vmatpush1.msra.mxu0 0.0
    %1518 = vmatprep.subr.mxu0 0.0
    %1519 = vmatpush1.msra.mxu0 0.0
    %1520 = vmatprep.subr.mxu0 0.0
    %1521 = vmatpush1.msra.mxu0 0.0
    %1522 = vmatprep.mubr.f32.mxu0 0.0
    %v1523 = vand.u32 %v207, 4294901760
    %1524 = vmatmul.mubr.f32.gmra.mrb[0].mxu0 %v1523
    %v1525 = vpop.f32.mrb[0].mxu0
    %v1526 = vadd.f32 %v1349, %v1525
    %v1527 = vpop.f32.mrb[0].mxu0
    %1528 = vmatprep.mubr.f32.mxu0 0.0
    %v1529 = vand.u32 %v208, 4294901760
    %1530 = vmatmul.mubr.f32.gmra.mrb[0].mxu0 %v1529
    %v1531 = vpop.f32.mrb[0].mxu0
    %v1532 = vadd.f32 %v1355, %v1531
    %v1533 = vpop.f32.mrb[0].mxu0
    %1534 = vmatprep.mubr.f32.mxu0 0.0
    %v1535 = vand.u32 %v209, 4294901760
    %1536 = vmatmul.mubr.f32.gmra.mrb[0].mxu0 %v1535
    %v1537 = vpop.f32.mrb[0].mxu0
    %v1538 = vadd.f32 %v1361, %v1537
    %v1539 = vpop.f32.mrb[0].mxu0
    %1540 = vmatprep.mubr.f32.mxu0 0.0
    %v1541 = vand.u32 %v210, 4294901760
    %1542 = vmatmul.mubr.f32.gmra.mrb[0].mxu0 %v1541
    %v1543 = vpop.f32.mrb[0].mxu0
    %v1544 = vadd.f32 %v1367, %v1543
    %v1545 = vpop.f32.mrb[0].mxu0
    %1546 = vmatprep.mubr.f32.mxu0 0.0
    %v1547 = vand.u32 %v211, 4294901760
    %1548 = vmatmul.mubr.f32.gmra.mrb[0].mxu0 %v1547
    %v1549 = vpop.f32.mrb[0].mxu0
    %v1550 = vadd.f32 %v1373, %v1549
    %v1551 = vpop.f32.mrb[0].mxu0
    %1552 = vmatprep.mubr.f32.mxu0 0.0
    %v1553 = vand.u32 %v212, 4294901760
    %1554 = vmatmul.mubr.f32.gmra.mrb[0].mxu0 %v1553
    %v1555 = vpop.f32.mrb[0].mxu0
    %v1556 = vadd.f32 %v1379, %v1555
    %v1557 = vpop.f32.mrb[0].mxu0
    %1558 = vmatprep.mubr.f32.mxu0 0.0
    %v1559 = vand.u32 %v213, 4294901760
    %1560 = vmatmul.mubr.f32.gmra.mrb[0].mxu0 %v1559
    %v1561 = vpop.f32.mrb[0].mxu0
    %v1562 = vadd.f32 %v1385, %v1561
    %v1563 = vpop.f32.mrb[0].mxu0
    %1564 = vmatprep.mubr.f32.mxu0 0.0
    %v1565 = vand.u32 %v214, 4294901760
    %1566 = vmatmul.mubr.f32.gmra.mrb[0].mxu0 %v1565
    %v1567 = vpop.f32.mrb[0].mxu0
    %v1568 = vadd.f32 %v1391, %v1567
    %v1569 = vpop.f32.mrb[0].mxu0
    %1570 = vmatprep.mubr.f32.mxu0 0.0
    %v1571 = vand.u32 %v215, 4294901760
    %1572 = vmatmul.mubr.f32.gmra.mrb[0].mxu0 %v1571
    %v1573 = vpop.f32.mrb[0].mxu0
    %v1574 = vadd.f32 %v1397, %v1573
    %v1575 = vpop.f32.mrb[0].mxu0
    %1576 = vmatprep.mubr.f32.mxu0 0.0
    %v1577 = vand.u32 %v216, 4294901760
    %1578 = vmatmul.mubr.f32.gmra.mrb[0].mxu0 %v1577
    %v1579 = vpop.f32.mrb[0].mxu0
    %v1580 = vadd.f32 %v1403, %v1579
    %v1581 = vpop.f32.mrb[0].mxu0
    %1582 = vmatprep.mubr.f32.mxu0 0.0
    %v1583 = vand.u32 %v217, 4294901760
    %1584 = vmatmul.mubr.f32.gmra.mrb[0].mxu0 %v1583
    %v1585 = vpop.f32.mrb[0].mxu0
    %v1586 = vadd.f32 %v1409, %v1585
    %v1587 = vpop.f32.mrb[0].mxu0
    %1588 = vmatprep.mubr.f32.mxu0 0.0
    %v1589 = vand.u32 %v218, 4294901760
    %1590 = vmatmul.mubr.f32.gmra.mrb[0].mxu0 %v1589
    %v1591 = vpop.f32.mrb[0].mxu0
    %v1592 = vadd.f32 %v1415, %v1591
    %v1593 = vpop.f32.mrb[0].mxu0
    %1594 = vmatprep.mubr.f32.mxu0 0.0
    %v1595 = vand.u32 %v219, 4294901760
    %1596 = vmatmul.mubr.f32.gmra.mrb[0].mxu0 %v1595
    %v1597 = vpop.f32.mrb[0].mxu0
    %v1598 = vadd.f32 %v1421, %v1597
    %v1599 = vpop.f32.mrb[0].mxu0
    %1600 = vmatprep.mubr.f32.mxu0 0.0
    %v1601 = vand.u32 %v220, 4294901760
    %1602 = vmatmul.mubr.f32.gmra.mrb[0].mxu0 %v1601
    %v1603 = vpop.f32.mrb[0].mxu0
    %v1604 = vadd.f32 %v1427, %v1603
    %v1605 = vpop.f32.mrb[0].mxu0
    %1606 = vmatprep.mubr.f32.mxu0 0.0
    %v1607 = vand.u32 %v221, 4294901760
    %1608 = vmatmul.mubr.f32.gmra.mrb[0].mxu0 %v1607
    %v1609 = vpop.f32.mrb[0].mxu0
    %v1610 = vadd.f32 %v1433, %v1609
    %v1611 = vpop.f32.mrb[0].mxu0
    %1612 = vmatprep.mubr.f32.mxu0 0.0
    %v1613 = vand.u32 %v222, 4294901760
    %1614 = vmatmul.mubr.f32.gmra.mrb[0].mxu0 %v1613
    %v1615 = vpop.f32.mrb[0].mxu0
    %v1616 = vadd.f32 %v1439, %v1615
    %v1617 = vpop.f32.mrb[0].mxu0
    %1618 = vdwg.mxu0
    %v1619 = vrcp.pop %v1526
    %v1620 = vrcp.pop %v1532
    %v1621 = vrcp.pop %v1538
    %v1622 = vrcp.pop %v1544
    %v1623 = vrcp.pop %v1550
    %v1624 = vrcp.pop %v1556
    %v1625 = vrcp.pop %v1562
    %v1626 = vrcp.pop %v1568
    %v1627 = vrcp.pop %v1574
    %v1628 = vrcp.pop %v1580
    %v1629 = vrcp.pop %v1586
    %v1630 = vrcp.pop %v1592
    %v1631 = vrcp.pop %v1598
    %v1632 = vrcp.pop %v1604
    %v1633 = vrcp.pop %v1610
    %v1634 = vrcp.pop %v1616
    %vm1635 = vcmask 31744
    %v1637 = vsel %vm1635, %v1619, 0
    %v1640 = vsel %vm1635, %v1620, 0
    %v1643 = vsel %vm1635, %v1621, 0
    %v1646 = vsel %vm1635, %v1622, 0
    %v1649 = vsel %vm1635, %v1623, 0
    %v1652 = vsel %vm1635, %v1624, 0
    %v1655 = vsel %vm1635, %v1625, 0
    %v1658 = vsel %vm1635, %v1626, 0
    %v1661 = vsel %vm1635, %v1627, 0
    %v1664 = vsel %vm1635, %v1628, 0
    %v1667 = vsel %vm1635, %v1629, 0
    %v1670 = vsel %vm1635, %v1630, 0
    %v1673 = vsel %vm1635, %v1631, 0
    %v1676 = vsel %vm1635, %v1632, 0
    %v1679 = vsel %vm1635, %v1633, 0
    %v1682 = vsel %vm1635, %v1634, 0
    %vm1684 = vcmask 1043456
    %v1686 = vsel %vm1684, %v332, 0
    %1688 = vmatprep.subr.mxu0 0.0
    %v1689 = vand.u32 %v1686, 4294901760
    %1690 = vmatpush1.msra.mxu0 %v1689
    %1691 = vmatprep.subr.mxu0 0.0
    %1692 = vmatpush1.msra.mxu0 0.0
    %1693 = vmatprep.subr.mxu0 0.0
    %1694 = vmatpush1.msra.mxu0 0.0
    %1695 = vmatprep.subr.mxu0 0.0
    %1696 = vmatpush1.msra.mxu0 0.0
    %1697 = vmatprep.subr.mxu0 0.0
    %1698 = vmatpush1.msra.mxu0 0.0
    %1699 = vmatprep.subr.mxu0 0.0
    %1700 = vmatpush1.msra.mxu0 0.0
    %1701 = vmatprep.subr.mxu0 0.0
    %1702 = vmatpush1.msra.mxu0 0.0
    %1703 = vmatprep.subr.mxu0 0.0
    %1704 = vmatpush1.msra.mxu0 0.0
    %1705 = vmatprep.subr.mxu0 0.0
    %1706 = vmatpush1.msra.mxu0 0.0
    %1707 = vmatprep.subr.mxu0 0.0
    %1708 = vmatpush1.msra.mxu0 0.0
    %1709 = vmatprep.subr.mxu0 0.0
    %1710 = vmatpush1.msra.mxu0 0.0
    %1711 = vmatprep.subr.mxu0 0.0
    %1712 = vmatpush1.msra.mxu0 0.0
    %1713 = vmatprep.subr.mxu0 0.0
    %1714 = vmatpush1.msra.mxu0 0.0
    %1715 = vmatprep.subr.mxu0 0.0
    %1716 = vmatpush1.msra.mxu0 0.0
    %1717 = vmatprep.subr.mxu0 0.0
    %1718 = vmatpush1.msra.mxu0 0.0
    %1719 = vmatprep.subr.mxu0 0.0
    %1720 = vmatpush1.msra.mxu0 0.0
    %1721 = vmatprep.subr.mxu0 0.0
    %1722 = vmatpush1.msra.mxu0 0.0
    %1723 = vmatprep.subr.mxu0 0.0
    %1724 = vmatpush1.msra.mxu0 0.0
    %1725 = vmatprep.subr.mxu0 0.0
    %1726 = vmatpush1.msra.mxu0 0.0
    %1727 = vmatprep.subr.mxu0 0.0
    %1728 = vmatpush1.msra.mxu0 0.0
    %1729 = vmatprep.subr.mxu0 0.0
    %1730 = vmatpush1.msra.mxu0 0.0
    %1731 = vmatprep.subr.mxu0 0.0
    %1732 = vmatpush1.msra.mxu0 0.0
    %1733 = vmatprep.subr.mxu0 0.0
    %1734 = vmatpush1.msra.mxu0 0.0
    %1735 = vmatprep.subr.mxu0 0.0
    %1736 = vmatpush1.msra.mxu0 0.0
    %1737 = vmatprep.subr.mxu0 0.0
    %1738 = vmatpush1.msra.mxu0 0.0
    %1739 = vmatprep.subr.mxu0 0.0
    %1740 = vmatpush1.msra.mxu0 0.0
    %1741 = vmatprep.subr.mxu0 0.0
    %1742 = vmatpush1.msra.mxu0 0.0
    %1743 = vmatprep.subr.mxu0 0.0
    %1744 = vmatpush1.msra.mxu0 0.0
    %1745 = vmatprep.subr.mxu0 0.0
    %1746 = vmatpush1.msra.mxu0 0.0
    %1747 = vmatprep.subr.mxu0 0.0
    %1748 = vmatpush1.msra.mxu0 0.0
    %1749 = vmatprep.subr.mxu0 0.0
    %1750 = vmatpush1.msra.mxu0 0.0
    %1751 = vmatprep.subr.mxu0 0.0
    %1752 = vmatpush1.msra.mxu0 0.0
    %1753 = vmatprep.mubr.f32.mxu0 0.0
    %v1754 = vand.u32 %v1637, 4294901760
    %v1755 = vsub.f32 %v1637, %v1754
    %v1756 = vand.u32 %v1755, 4294901760
    %v1757 = vsub.f32 %v1755, %v1756
    %v1758 = vand.u32 %v1757, 4294901760
    %1759 = vmatmul.mubr.f32.gmra.mrb[0].mxu0 %v1758
    %v1760 = vpop.f32.mrb[0].mxu0
    %v1761 = vadd.f32 0.0, %v1760
    %v1762 = vpop.f32.mrb[0].mxu0
    %1763 = vmatprep.mubr.f32.mxu0 0.0
    %v1764 = vand.u32 %v1640, 4294901760
    %v1765 = vsub.f32 %v1640, %v1764
    %v1766 = vand.u32 %v1765, 4294901760
    %v1767 = vsub.f32 %v1765, %v1766
    %v1768 = vand.u32 %v1767, 4294901760
    %1769 = vmatmul.mubr.f32.gmra.mrb[0].mxu0 %v1768
    %v1770 = vpop.f32.mrb[0].mxu0
    %v1771 = vadd.f32 0.0, %v1770
    %v1772 = vpop.f32.mrb[0].mxu0
    %1773 = vmatprep.mubr.f32.mxu0 0.0
    %v1774 = vand.u32 %v1643, 4294901760
    %v1775 = vsub.f32 %v1643, %v1774
    %v1776 = vand.u32 %v1775, 4294901760
    %v1777 = vsub.f32 %v1775, %v1776
    %v1778 = vand.u32 %v1777, 4294901760
    %1779 = vmatmul.mubr.f32.gmra.mrb[0].mxu0 %v1778
    %v1780 = vpop.f32.mrb[0].mxu0
    %v1781 = vadd.f32 0.0, %v1780
    %v1782 = vpop.f32.mrb[0].mxu0
    %1783 = vmatprep.mubr.f32.mxu0 0.0
    %v1784 = vand.u32 %v1646, 4294901760
    %v1785 = vsub.f32 %v1646, %v1784
    %v1786 = vand.u32 %v1785, 4294901760
    %v1787 = vsub.f32 %v1785, %v1786
    %v1788 = vand.u32 %v1787, 4294901760
    %1789 = vmatmul.mubr.f32.gmra.mrb[0].mxu0 %v1788
    %v1790 = vpop.f32.mrb[0].mxu0
    %v1791 = vadd.f32 0.0, %v1790
    %v1792 = vpop.f32.mrb[0].mxu0
    %1793 = vmatprep.mubr.f32.mxu0 0.0
    %v1794 = vand.u32 %v1649, 4294901760
    %v1795 = vsub.f32 %v1649, %v1794
    %v1796 = vand.u32 %v1795, 4294901760
    %v1797 = vsub.f32 %v1795, %v1796
    %v1798 = vand.u32 %v1797, 4294901760
    %1799 = vmatmul.mubr.f32.gmra.mrb[0].mxu0 %v1798
    %v1800 = vpop.f32.mrb[0].mxu0
    %v1801 = vadd.f32 0.0, %v1800
    %v1802 = vpop.f32.mrb[0].mxu0
    %1803 = vmatprep.mubr.f32.mxu0 0.0
    %v1804 = vand.u32 %v1652, 4294901760
    %v1805 = vsub.f32 %v1652, %v1804
    %v1806 = vand.u32 %v1805, 4294901760
    %v1807 = vsub.f32 %v1805, %v1806
    %v1808 = vand.u32 %v1807, 4294901760
    %1809 = vmatmul.mubr.f32.gmra.mrb[0].mxu0 %v1808
    %v1810 = vpop.f32.mrb[0].mxu0
    %v1811 = vadd.f32 0.0, %v1810
    %v1812 = vpop.f32.mrb[0].mxu0
    %1813 = vmatprep.mubr.f32.mxu0 0.0
    %v1814 = vand.u32 %v1655, 4294901760
    %v1815 = vsub.f32 %v1655, %v1814
    %v1816 = vand.u32 %v1815, 4294901760
    %v1817 = vsub.f32 %v1815, %v1816
    %v1818 = vand.u32 %v1817, 4294901760
    %1819 = vmatmul.mubr.f32.gmra.mrb[0].mxu0 %v1818
    %v1820 = vpop.f32.mrb[0].mxu0
    %v1821 = vadd.f32 0.0, %v1820
    %v1822 = vpop.f32.mrb[0].mxu0
    %1823 = vmatprep.mubr.f32.mxu0 0.0
    %v1824 = vand.u32 %v1658, 4294901760
    %v1825 = vsub.f32 %v1658, %v1824
    %v1826 = vand.u32 %v1825, 4294901760
    %v1827 = vsub.f32 %v1825, %v1826
    %v1828 = vand.u32 %v1827, 4294901760
    %1829 = vmatmul.mubr.f32.gmra.mrb[0].mxu0 %v1828
    %v1830 = vpop.f32.mrb[0].mxu0
    %v1831 = vadd.f32 0.0, %v1830
    %v1832 = vpop.f32.mrb[0].mxu0
    %1833 = vmatprep.mubr.f32.mxu0 0.0
    %v1834 = vand.u32 %v1661, 4294901760
    %v1835 = vsub.f32 %v1661, %v1834
    %v1836 = vand.u32 %v1835, 4294901760
    %v1837 = vsub.f32 %v1835, %v1836
    %v1838 = vand.u32 %v1837, 4294901760
    %1839 = vmatmul.mubr.f32.gmra.mrb[0].mxu0 %v1838
    %v1840 = vpop.f32.mrb[0].mxu0
    %v1841 = vadd.f32 0.0, %v1840
    %v1842 = vpop.f32.mrb[0].mxu0
    %1843 = vmatprep.mubr.f32.mxu0 0.0
    %v1844 = vand.u32 %v1664, 4294901760
    %v1845 = vsub.f32 %v1664, %v1844
    %v1846 = vand.u32 %v1845, 4294901760
    %v1847 = vsub.f32 %v1845, %v1846
    %v1848 = vand.u32 %v1847, 4294901760
    %1849 = vmatmul.mubr.f32.gmra.mrb[0].mxu0 %v1848
    %v1850 = vpop.f32.mrb[0].mxu0
    %v1851 = vadd.f32 0.0, %v1850
    %v1852 = vpop.f32.mrb[0].mxu0
    %1853 = vmatprep.mubr.f32.mxu0 0.0
    %v1854 = vand.u32 %v1667, 4294901760
    %v1855 = vsub.f32 %v1667, %v1854
    %v1856 = vand.u32 %v1855, 4294901760
    %v1857 = vsub.f32 %v1855, %v1856
    %v1858 = vand.u32 %v1857, 4294901760
    %1859 = vmatmul.mubr.f32.gmra.mrb[0].mxu0 %v1858
    %v1860 = vpop.f32.mrb[0].mxu0
    %v1861 = vadd.f32 0.0, %v1860
    %v1862 = vpop.f32.mrb[0].mxu0
    %1863 = vmatprep.mubr.f32.mxu0 0.0
    %v1864 = vand.u32 %v1670, 4294901760
    %v1865 = vsub.f32 %v1670, %v1864
    %v1866 = vand.u32 %v1865, 4294901760
    %v1867 = vsub.f32 %v1865, %v1866
    %v1868 = vand.u32 %v1867, 4294901760
    %1869 = vmatmul.mubr.f32.gmra.mrb[0].mxu0 %v1868
    %v1870 = vpop.f32.mrb[0].mxu0
    %v1871 = vadd.f32 0.0, %v1870
    %v1872 = vpop.f32.mrb[0].mxu0
    %1873 = vmatprep.mubr.f32.mxu0 0.0
    %v1874 = vand.u32 %v1673, 4294901760
    %v1875 = vsub.f32 %v1673, %v1874
    %v1876 = vand.u32 %v1875, 4294901760
    %v1877 = vsub.f32 %v1875, %v1876
    %v1878 = vand.u32 %v1877, 4294901760
    %1879 = vmatmul.mubr.f32.gmra.mrb[0].mxu0 %v1878
    %v1880 = vpop.f32.mrb[0].mxu0
    %v1881 = vadd.f32 0.0, %v1880
    %v1882 = vpop.f32.mrb[0].mxu0
    %1883 = vmatprep.mubr.f32.mxu0 0.0
    %v1884 = vand.u32 %v1676, 4294901760
    %v1885 = vsub.f32 %v1676, %v1884
    %v1886 = vand.u32 %v1885, 4294901760
    %v1887 = vsub.f32 %v1885, %v1886
    %v1888 = vand.u32 %v1887, 4294901760
    %1889 = vmatmul.mubr.f32.gmra.mrb[0].mxu0 %v1888
    %v1890 = vpop.f32.mrb[0].mxu0
    %v1891 = vadd.f32 0.0, %v1890
    %v1892 = vpop.f32.mrb[0].mxu0
    %1893 = vmatprep.mubr.f32.mxu0 0.0
    %v1894 = vand.u32 %v1679, 4294901760
    %v1895 = vsub.f32 %v1679, %v1894
    %v1896 = vand.u32 %v1895, 4294901760
    %v1897 = vsub.f32 %v1895, %v1896
    %v1898 = vand.u32 %v1897, 4294901760
    %1899 = vmatmul.mubr.f32.gmra.mrb[0].mxu0 %v1898
    %v1900 = vpop.f32.mrb[0].mxu0
    %v1901 = vadd.f32 0.0, %v1900
    %v1902 = vpop.f32.mrb[0].mxu0
    %1903 = vmatprep.mubr.f32.mxu0 0.0
    %v1904 = vand.u32 %v1682, 4294901760
    %v1905 = vsub.f32 %v1682, %v1904
    %v1906 = vand.u32 %v1905, 4294901760
    %v1907 = vsub.f32 %v1905, %v1906
    %v1908 = vand.u32 %v1907, 4294901760
    %1909 = vmatmul.mubr.f32.gmra.mrb[0].mxu0 %v1908
    %v1910 = vpop.f32.mrb[0].mxu0
    %v1911 = vadd.f32 0.0, %v1910
    %v1912 = vpop.f32.mrb[0].mxu0
    %1913 = vdwg.mxu0
    %1914 = vmatprep.subr.mxu0 0.0
    %v1915 = vand.u32 %v1686, 4294901760
    %v1916 = vsub.f32 %v1686, %v1915
    %v1917 = vand.u32 %v1916, 4294901760
    %v1918 = vsub.f32 %v1916, %v1917
    %v1919 = vand.u32 %v1918, 4294901760
    %1920 = vmatpush1.msra.mxu0 %v1919
    %1921 = vmatprep.subr.mxu0 0.0
    %1922 = vmatpush1.msra.mxu0 0.0
    %1923 = vmatprep.subr.mxu0 0.0
    %1924 = vmatpush1.msra.mxu0 0.0
    %1925 = vmatprep.subr.mxu0 0.0
    %1926 = vmatpush1.msra.mxu0 0.0
    %1927 = vmatprep.subr.mxu0 0.0
    %1928 = vmatpush1.msra.mxu0 0.0
    %1929 = vmatprep.subr.mxu0 0.0
    %1930 = vmatpush1.msra.mxu0 0.0
    %1931 = vmatprep.subr.mxu0 0.0
    %1932 = vmatpush1.msra.mxu0 0.0
    %1933 = vmatprep.subr.mxu0 0.0
    %1934 = vmatpush1.msra.mxu0 0.0
    %1935 = vmatprep.subr.mxu0 0.0
    %1936 = vmatpush1.msra.mxu0 0.0
    %1937 = vmatprep.subr.mxu0 0.0
    %1938 = vmatpush1.msra.mxu0 0.0
    %1939 = vmatprep.subr.mxu0 0.0
    %1940 = vmatpush1.msra.mxu0 0.0
    %1941 = vmatprep.subr.mxu0 0.0
    %1942 = vmatpush1.msra.mxu0 0.0
    %1943 = vmatprep.subr.mxu0 0.0
    %1944 = vmatpush1.msra.mxu0 0.0
    %1945 = vmatprep.subr.mxu0 0.0
    %1946 = vmatpush1.msra.mxu0 0.0
    %1947 = vmatprep.subr.mxu0 0.0
    %1948 = vmatpush1.msra.mxu0 0.0
    %1949 = vmatprep.subr.mxu0 0.0
    %1950 = vmatpush1.msra.mxu0 0.0
    %1951 = vmatprep.subr.mxu0 0.0
    %1952 = vmatpush1.msra.mxu0 0.0
    %1953 = vmatprep.subr.mxu0 0.0
    %1954 = vmatpush1.msra.mxu0 0.0
    %1955 = vmatprep.subr.mxu0 0.0
    %1956 = vmatpush1.msra.mxu0 0.0
    %1957 = vmatprep.subr.mxu0 0.0
    %1958 = vmatpush1.msra.mxu0 0.0
    %1959 = vmatprep.subr.mxu0 0.0
    %1960 = vmatpush1.msra.mxu0 0.0
    %1961 = vmatprep.subr.mxu0 0.0
    %1962 = vmatpush1.msra.mxu0 0.0
    %1963 = vmatprep.subr.mxu0 0.0
    %1964 = vmatpush1.msra.mxu0 0.0
    %1965 = vmatprep.subr.mxu0 0.0
    %1966 = vmatpush1.msra.mxu0 0.0
    %1967 = vmatprep.subr.mxu0 0.0
    %1968 = vmatpush1.msra.mxu0 0.0
    %1969 = vmatprep.subr.mxu0 0.0
    %1970 = vmatpush1.msra.mxu0 0.0
    %1971 = vmatprep.subr.mxu0 0.0
    %1972 = vmatpush1.msra.mxu0 0.0
    %1973 = vmatprep.subr.mxu0 0.0
    %1974 = vmatpush1.msra.mxu0 0.0
    %1975 = vmatprep.subr.mxu0 0.0
    %1976 = vmatpush1.msra.mxu0 0.0
    %1977 = vmatprep.subr.mxu0 0.0
    %1978 = vmatpush1.msra.mxu0 0.0
    %1979 = vmatprep.subr.mxu0 0.0
    %1980 = vmatpush1.msra.mxu0 0.0
    %1981 = vmatprep.subr.mxu0 0.0
    %1982 = vmatpush1.msra.mxu0 0.0
    %1983 = vmatprep.mubr.f32.mxu0 0.0
    %v1984 = vand.u32 %v1637, 4294901760
    %1985 = vmatmul.mubr.f32.gmra.mrb[0].mxu0 %v1984
    %v1986 = vpop.f32.mrb[0].mxu0
    %v1987 = vadd.f32 %v1761, %v1986
    %v1988 = vpop.f32.mrb[0].mxu0
    %1989 = vmatprep.mubr.f32.mxu0 0.0
    %v1990 = vand.u32 %v1640, 4294901760
    %1991 = vmatmul.mubr.f32.gmra.mrb[0].mxu0 %v1990
    %v1992 = vpop.f32.mrb[0].mxu0
    %v1993 = vadd.f32 %v1771, %v1992
    %v1994 = vpop.f32.mrb[0].mxu0
    %1995 = vmatprep.mubr.f32.mxu0 0.0
    %v1996 = vand.u32 %v1643, 4294901760
    %1997 = vmatmul.mubr.f32.gmra.mrb[0].mxu0 %v1996
    %v1998 = vpop.f32.mrb[0].mxu0
    %v1999 = vadd.f32 %v1781, %v1998
    %v2000 = vpop.f32.mrb[0].mxu0
    %2001 = vmatprep.mubr.f32.mxu0 0.0
    %v2002 = vand.u32 %v1646, 4294901760
    %2003 = vmatmul.mubr.f32.gmra.mrb[0].mxu0 %v2002
    %v2004 = vpop.f32.mrb[0].mxu0
    %v2005 = vadd.f32 %v1791, %v2004
    %v2006 = vpop.f32.mrb[0].mxu0
    %2007 = vmatprep.mubr.f32.mxu0 0.0
    %v2008 = vand.u32 %v1649, 4294901760
    %2009 = vmatmul.mubr.f32.gmra.mrb[0].mxu0 %v2008
    %v2010 = vpop.f32.mrb[0].mxu0
    %v2011 = vadd.f32 %v1801, %v2010
    %v2012 = vpop.f32.mrb[0].mxu0
    %2013 = vmatprep.mubr.f32.mxu0 0.0
    %v2014 = vand.u32 %v1652, 4294901760
    %2015 = vmatmul.mubr.f32.gmra.mrb[0].mxu0 %v2014
    %v2016 = vpop.f32.mrb[0].mxu0
    %v2017 = vadd.f32 %v1811, %v2016
    %v2018 = vpop.f32.mrb[0].mxu0
    %2019 = vmatprep.mubr.f32.mxu0 0.0
    %v2020 = vand.u32 %v1655, 4294901760
    %2021 = vmatmul.mubr.f32.gmra.mrb[0].mxu0 %v2020
    %v2022 = vpop.f32.mrb[0].mxu0
    %v2023 = vadd.f32 %v1821, %v2022
    %v2024 = vpop.f32.mrb[0].mxu0
    %2025 = vmatprep.mubr.f32.mxu0 0.0
    %v2026 = vand.u32 %v1658, 4294901760
    %2027 = vmatmul.mubr.f32.gmra.mrb[0].mxu0 %v2026
    %v2028 = vpop.f32.mrb[0].mxu0
    %v2029 = vadd.f32 %v1831, %v2028
    %v2030 = vpop.f32.mrb[0].mxu0
    %2031 = vmatprep.mubr.f32.mxu0 0.0
    %v2032 = vand.u32 %v1661, 4294901760
    %2033 = vmatmul.mubr.f32.gmra.mrb[0].mxu0 %v2032
    %v2034 = vpop.f32.mrb[0].mxu0
    %v2035 = vadd.f32 %v1841, %v2034
    %v2036 = vpop.f32.mrb[0].mxu0
    %2037 = vmatprep.mubr.f32.mxu0 0.0
    %v2038 = vand.u32 %v1664, 4294901760
    %2039 = vmatmul.mubr.f32.gmra.mrb[0].mxu0 %v2038
    %v2040 = vpop.f32.mrb[0].mxu0
    %v2041 = vadd.f32 %v1851, %v2040
    %v2042 = vpop.f32.mrb[0].mxu0
    %2043 = vmatprep.mubr.f32.mxu0 0.0
    %v2044 = vand.u32 %v1667, 4294901760
    %2045 = vmatmul.mubr.f32.gmra.mrb[0].mxu0 %v2044
    %v2046 = vpop.f32.mrb[0].mxu0
    %v2047 = vadd.f32 %v1861, %v2046
    %v2048 = vpop.f32.mrb[0].mxu0
    %2049 = vmatprep.mubr.f32.mxu0 0.0
    %v2050 = vand.u32 %v1670, 4294901760
    %2051 = vmatmul.mubr.f32.gmra.mrb[0].mxu0 %v2050
    %v2052 = vpop.f32.mrb[0].mxu0
    %v2053 = vadd.f32 %v1871, %v2052
    %v2054 = vpop.f32.mrb[0].mxu0
    %2055 = vmatprep.mubr.f32.mxu0 0.0
    %v2056 = vand.u32 %v1673, 4294901760
    %2057 = vmatmul.mubr.f32.gmra.mrb[0].mxu0 %v2056
    %v2058 = vpop.f32.mrb[0].mxu0
    %v2059 = vadd.f32 %v1881, %v2058
    %v2060 = vpop.f32.mrb[0].mxu0
    %2061 = vmatprep.mubr.f32.mxu0 0.0
    %v2062 = vand.u32 %v1676, 4294901760
    %2063 = vmatmul.mubr.f32.gmra.mrb[0].mxu0 %v2062
    %v2064 = vpop.f32.mrb[0].mxu0
    %v2065 = vadd.f32 %v1891, %v2064
    %v2066 = vpop.f32.mrb[0].mxu0
    %2067 = vmatprep.mubr.f32.mxu0 0.0
    %v2068 = vand.u32 %v1679, 4294901760
    %2069 = vmatmul.mubr.f32.gmra.mrb[0].mxu0 %v2068
    %v2070 = vpop.f32.mrb[0].mxu0
    %v2071 = vadd.f32 %v1901, %v2070
    %v2072 = vpop.f32.mrb[0].mxu0
    %2073 = vmatprep.mubr.f32.mxu0 0.0
    %v2074 = vand.u32 %v1682, 4294901760
    %2075 = vmatmul.mubr.f32.gmra.mrb[0].mxu0 %v2074
    %v2076 = vpop.f32.mrb[0].mxu0
    %v2077 = vadd.f32 %v1911, %v2076
    %v2078 = vpop.f32.mrb[0].mxu0
    %2079 = vdwg.mxu0
    %2080 = vmatprep.subr.mxu0 0.0
    %v2081 = vand.u32 %v1686, 4294901760
    %v2082 = vsub.f32 %v1686, %v2081
    %2083 = vmatpush1.msra.mxu0 %v2082
    %2084 = vmatprep.subr.mxu0 0.0
    %2085 = vmatpush1.msra.mxu0 0.0
    %2086 = vmatprep.subr.mxu0 0.0
    %2087 = vmatpush1.msra.mxu0 0.0
    %2088 = vmatprep.subr.mxu0 0.0
    %2089 = vmatpush1.msra.mxu0 0.0
    %2090 = vmatprep.subr.mxu0 0.0
    %2091 = vmatpush1.msra.mxu0 0.0
    %2092 = vmatprep.subr.mxu0 0.0
    %2093 = vmatpush1.msra.mxu0 0.0
    %2094 = vmatprep.subr.mxu0 0.0
    %2095 = vmatpush1.msra.mxu0 0.0
    %2096 = vmatprep.subr.mxu0 0.0
    %2097 = vmatpush1.msra.mxu0 0.0
    %2098 = vmatprep.subr.mxu0 0.0
    %2099 = vmatpush1.msra.mxu0 0.0
    %2100 = vmatprep.subr.mxu0 0.0
    %2101 = vmatpush1.msra.mxu0 0.0
    %2102 = vmatprep.subr.mxu0 0.0
    %2103 = vmatpush1.msra.mxu0 0.0
    %2104 = vmatprep.subr.mxu0 0.0
    %2105 = vmatpush1.msra.mxu0 0.0
    %2106 = vmatprep.subr.mxu0 0.0
    %2107 = vmatpush1.msra.mxu0 0.0
    %2108 = vmatprep.subr.mxu0 0.0
    %2109 = vmatpush1.msra.mxu0 0.0
    %2110 = vmatprep.subr.mxu0 0.0
    %2111 = vmatpush1.msra.mxu0 0.0
    %2112 = vmatprep.subr.mxu0 0.0
    %2113 = vmatpush1.msra.mxu0 0.0
    %2114 = vmatprep.subr.mxu0 0.0
    %2115 = vmatpush1.msra.mxu0 0.0
    %2116 = vmatprep.subr.mxu0 0.0
    %2117 = vmatpush1.msra.mxu0 0.0
    %2118 = vmatprep.subr.mxu0 0.0
    %2119 = vmatpush1.msra.mxu0 0.0
    %2120 = vmatprep.subr.mxu0 0.0
    %2121 = vmatpush1.msra.mxu0 0.0
    %2122 = vmatprep.subr.mxu0 0.0
    %2123 = vmatpush1.msra.mxu0 0.0
    %2124 = vmatprep.subr.mxu0 0.0
    %2125 = vmatpush1.msra.mxu0 0.0
    %2126 = vmatprep.subr.mxu0 0.0
    %2127 = vmatpush1.msra.mxu0 0.0
    %2128 = vmatprep.subr.mxu0 0.0
    %2129 = vmatpush1.msra.mxu0 0.0
    %2130 = vmatprep.subr.mxu0 0.0
    %2131 = vmatpush1.msra.mxu0 0.0
    %2132 = vmatprep.subr.mxu0 0.0
    %2133 = vmatpush1.msra.mxu0 0.0
    %2134 = vmatprep.subr.mxu0 0.0
    %2135 = vmatpush1.msra.mxu0 0.0
    %2136 = vmatprep.subr.mxu0 0.0
    %2137 = vmatpush1.msra.mxu0 0.0
    %2138 = vmatprep.subr.mxu0 0.0
    %2139 = vmatpush1.msra.mxu0 0.0
    %2140 = vmatprep.subr.mxu0 0.0
    %2141 = vmatpush1.msra.mxu0 0.0
    %2142 = vmatprep.subr.mxu0 0.0
    %2143 = vmatpush1.msra.mxu0 0.0
    %2144 = vmatprep.subr.mxu0 0.0
    %2145 = vmatpush1.msra.mxu0 0.0
    %2146 = vmatprep.mubr.f32.mxu0 0.0
    %v2147 = vand.u32 %v1637, 4294901760
    %v2148 = vsub.f32 %v1637, %v2147
    %2149 = vmatmul.mubr.f32.gmra.mrb[0].mxu0 %v2148
    %v2150 = vpop.f32.mrb[0].mxu0
    %v2151 = vadd.f32 %v1987, %v2150
    %v2152 = vpop.f32.mrb[0].mxu0
    %2153 = vmatprep.mubr.f32.mxu0 0.0
    %v2154 = vand.u32 %v1640, 4294901760
    %v2155 = vsub.f32 %v1640, %v2154
    %2156 = vmatmul.mubr.f32.gmra.mrb[0].mxu0 %v2155
    %v2157 = vpop.f32.mrb[0].mxu0
    %v2158 = vadd.f32 %v1993, %v2157
    %v2159 = vpop.f32.mrb[0].mxu0
    %2160 = vmatprep.mubr.f32.mxu0 0.0
    %v2161 = vand.u32 %v1643, 4294901760
    %v2162 = vsub.f32 %v1643, %v2161
    %2163 = vmatmul.mubr.f32.gmra.mrb[0].mxu0 %v2162
    %v2164 = vpop.f32.mrb[0].mxu0
    %v2165 = vadd.f32 %v1999, %v2164
    %v2166 = vpop.f32.mrb[0].mxu0
    %2167 = vmatprep.mubr.f32.mxu0 0.0
    %v2168 = vand.u32 %v1646, 4294901760
    %v2169 = vsub.f32 %v1646, %v2168
    %2170 = vmatmul.mubr.f32.gmra.mrb[0].mxu0 %v2169
    %v2171 = vpop.f32.mrb[0].mxu0
    %v2172 = vadd.f32 %v2005, %v2171
    %v2173 = vpop.f32.mrb[0].mxu0
    %2174 = vmatprep.mubr.f32.mxu0 0.0
    %v2175 = vand.u32 %v1649, 4294901760
    %v2176 = vsub.f32 %v1649, %v2175
    %2177 = vmatmul.mubr.f32.gmra.mrb[0].mxu0 %v2176
    %v2178 = vpop.f32.mrb[0].mxu0
    %v2179 = vadd.f32 %v2011, %v2178
    %v2180 = vpop.f32.mrb[0].mxu0
    %2181 = vmatprep.mubr.f32.mxu0 0.0
    %v2182 = vand.u32 %v1652, 4294901760
    %v2183 = vsub.f32 %v1652, %v2182
    %2184 = vmatmul.mubr.f32.gmra.mrb[0].mxu0 %v2183
    %v2185 = vpop.f32.mrb[0].mxu0
    %v2186 = vadd.f32 %v2017, %v2185
    %v2187 = vpop.f32.mrb[0].mxu0
    %2188 = vmatprep.mubr.f32.mxu0 0.0
    %v2189 = vand.u32 %v1655, 4294901760
    %v2190 = vsub.f32 %v1655, %v2189
    %2191 = vmatmul.mubr.f32.gmra.mrb[0].mxu0 %v2190
    %v2192 = vpop.f32.mrb[0].mxu0
    %v2193 = vadd.f32 %v2023, %v2192
    %v2194 = vpop.f32.mrb[0].mxu0
    %2195 = vmatprep.mubr.f32.mxu0 0.0
    %v2196 = vand.u32 %v1658, 4294901760
    %v2197 = vsub.f32 %v1658, %v2196
    %2198 = vmatmul.mubr.f32.gmra.mrb[0].mxu0 %v2197
    %v2199 = vpop.f32.mrb[0].mxu0
    %v2200 = vadd.f32 %v2029, %v2199
    %v2201 = vpop.f32.mrb[0].mxu0
    %2202 = vmatprep.mubr.f32.mxu0 0.0
    %v2203 = vand.u32 %v1661, 4294901760
    %v2204 = vsub.f32 %v1661, %v2203
    %2205 = vmatmul.mubr.f32.gmra.mrb[0].mxu0 %v2204
    %v2206 = vpop.f32.mrb[0].mxu0
    %v2207 = vadd.f32 %v2035, %v2206
    %v2208 = vpop.f32.mrb[0].mxu0
    %2209 = vmatprep.mubr.f32.mxu0 0.0
    %v2210 = vand.u32 %v1664, 4294901760
    %v2211 = vsub.f32 %v1664, %v2210
    %2212 = vmatmul.mubr.f32.gmra.mrb[0].mxu0 %v2211
    %v2213 = vpop.f32.mrb[0].mxu0
    %v2214 = vadd.f32 %v2041, %v2213
    %v2215 = vpop.f32.mrb[0].mxu0
    %2216 = vmatprep.mubr.f32.mxu0 0.0
    %v2217 = vand.u32 %v1667, 4294901760
    %v2218 = vsub.f32 %v1667, %v2217
    %2219 = vmatmul.mubr.f32.gmra.mrb[0].mxu0 %v2218
    %v2220 = vpop.f32.mrb[0].mxu0
    %v2221 = vadd.f32 %v2047, %v2220
    %v2222 = vpop.f32.mrb[0].mxu0
    %2223 = vmatprep.mubr.f32.mxu0 0.0
    %v2224 = vand.u32 %v1670, 4294901760
    %v2225 = vsub.f32 %v1670, %v2224
    %2226 = vmatmul.mubr.f32.gmra.mrb[0].mxu0 %v2225
    %v2227 = vpop.f32.mrb[0].mxu0
    %v2228 = vadd.f32 %v2053, %v2227
    %v2229 = vpop.f32.mrb[0].mxu0
    %2230 = vmatprep.mubr.f32.mxu0 0.0
    %v2231 = vand.u32 %v1673, 4294901760
    %v2232 = vsub.f32 %v1673, %v2231
    %2233 = vmatmul.mubr.f32.gmra.mrb[0].mxu0 %v2232
    %v2234 = vpop.f32.mrb[0].mxu0
    %v2235 = vadd.f32 %v2059, %v2234
    %v2236 = vpop.f32.mrb[0].mxu0
    %2237 = vmatprep.mubr.f32.mxu0 0.0
    %v2238 = vand.u32 %v1676, 4294901760
    %v2239 = vsub.f32 %v1676, %v2238
    %2240 = vmatmul.mubr.f32.gmra.mrb[0].mxu0 %v2239
    %v2241 = vpop.f32.mrb[0].mxu0
    %v2242 = vadd.f32 %v2065, %v2241
    %v2243 = vpop.f32.mrb[0].mxu0
    %2244 = vmatprep.mubr.f32.mxu0 0.0
    %v2245 = vand.u32 %v1679, 4294901760
    %v2246 = vsub.f32 %v1679, %v2245
    %2247 = vmatmul.mubr.f32.gmra.mrb[0].mxu0 %v2246
    %v2248 = vpop.f32.mrb[0].mxu0
    %v2249 = vadd.f32 %v2071, %v2248
    %v2250 = vpop.f32.mrb[0].mxu0
    %2251 = vmatprep.mubr.f32.mxu0 0.0
    %v2252 = vand.u32 %v1682, 4294901760
    %v2253 = vsub.f32 %v1682, %v2252
    %2254 = vmatmul.mubr.f32.gmra.mrb[0].mxu0 %v2253
    %v2255 = vpop.f32.mrb[0].mxu0
    %v2256 = vadd.f32 %v2077, %v2255
    %v2257 = vpop.f32.mrb[0].mxu0
    %2258 = vdwg.mxu0
    %2259 = vmatprep.subr.mxu0 0.0
    %v2260 = vand.u32 %v1686, 4294901760
    %2261 = vmatpush1.msra.mxu0 %v2260
    %2262 = vmatprep.subr.mxu0 0.0
    %2263 = vmatpush1.msra.mxu0 0.0
    %2264 = vmatprep.subr.mxu0 0.0
    %2265 = vmatpush1.msra.mxu0 0.0
    %2266 = vmatprep.subr.mxu0 0.0
    %2267 = vmatpush1.msra.mxu0 0.0
    %2268 = vmatprep.subr.mxu0 0.0
    %2269 = vmatpush1.msra.mxu0 0.0
    %2270 = vmatprep.subr.mxu0 0.0
    %2271 = vmatpush1.msra.mxu0 0.0
    %2272 = vmatprep.subr.mxu0 0.0
    %2273 = vmatpush1.msra.mxu0 0.0
    %2274 = vmatprep.subr.mxu0 0.0
    %2275 = vmatpush1.msra.mxu0 0.0
    %2276 = vmatprep.subr.mxu0 0.0
    %2277 = vmatpush1.msra.mxu0 0.0
    %2278 = vmatprep.subr.mxu0 0.0
    %2279 = vmatpush1.msra.mxu0 0.0
    %2280 = vmatprep.subr.mxu0 0.0
    %2281 = vmatpush1.msra.mxu0 0.0
    %2282 = vmatprep.subr.mxu0 0.0
    %2283 = vmatpush1.msra.mxu0 0.0
    %2284 = vmatprep.subr.mxu0 0.0
    %2285 = vmatpush1.msra.mxu0 0.0
    %2286 = vmatprep.subr.mxu0 0.0
    %2287 = vmatpush1.msra.mxu0 0.0
    %2288 = vmatprep.subr.mxu0 0.0
    %2289 = vmatpush1.msra.mxu0 0.0
    %2290 = vmatprep.subr.mxu0 0.0
    %2291 = vmatpush1.msra.mxu0 0.0
    %2292 = vmatprep.subr.mxu0 0.0
    %2293 = vmatpush1.msra.mxu0 0.0
    %2294 = vmatprep.subr.mxu0 0.0
    %2295 = vmatpush1.msra.mxu0 0.0
    %2296 = vmatprep.subr.mxu0 0.0
    %2297 = vmatpush1.msra.mxu0 0.0
    %2298 = vmatprep.subr.mxu0 0.0
    %2299 = vmatpush1.msra.mxu0 0.0
    %2300 = vmatprep.subr.mxu0 0.0
    %2301 = vmatpush1.msra.mxu0 0.0
    %2302 = vmatprep.subr.mxu0 0.0
    %2303 = vmatpush1.msra.mxu0 0.0
    %2304 = vmatprep.subr.mxu0 0.0
    %2305 = vmatpush1.msra.mxu0 0.0
    %2306 = vmatprep.subr.mxu0 0.0
    %2307 = vmatpush1.msra.mxu0 0.0
    %2308 = vmatprep.subr.mxu0 0.0
    %2309 = vmatpush1.msra.mxu0 0.0
    %2310 = vmatprep.subr.mxu0 0.0
    %2311 = vmatpush1.msra.mxu0 0.0
    %2312 = vmatprep.subr.mxu0 0.0
    %2313 = vmatpush1.msra.mxu0 0.0
    %2314 = vmatprep.subr.mxu0 0.0
    %2315 = vmatpush1.msra.mxu0 0.0
    %2316 = vmatprep.subr.mxu0 0.0
    %2317 = vmatpush1.msra.mxu0 0.0
    %2318 = vmatprep.subr.mxu0 0.0
    %2319 = vmatpush1.msra.mxu0 0.0
    %2320 = vmatprep.subr.mxu0 0.0
    %2321 = vmatpush1.msra.mxu0 0.0
    %2322 = vmatprep.subr.mxu0 0.0
    %2323 = vmatpush1.msra.mxu0 0.0
    %2324 = vmatprep.mubr.f32.mxu0 0.0
    %v2325 = vand.u32 %v1637, 4294901760
    %v2326 = vsub.f32 %v1637, %v2325
    %v2327 = vand.u32 %v2326, 4294901760
    %2328 = vmatmul.mubr.f32.gmra.mrb[0].mxu0 %v2327
    %v2329 = vpop.f32.mrb[0].mxu0
    %v2330 = vadd.f32 %v2151, %v2329
    %v2331 = vpop.f32.mrb[0].mxu0
    %2332 = vmatprep.mubr.f32.mxu0 0.0
    %v2333 = vand.u32 %v1640, 4294901760
    %v2334 = vsub.f32 %v1640, %v2333
    %v2335 = vand.u32 %v2334, 4294901760
    %2336 = vmatmul.mubr.f32.gmra.mrb[0].mxu0 %v2335
    %v2337 = vpop.f32.mrb[0].mxu0
    %v2338 = vadd.f32 %v2158, %v2337
    %v2339 = vpop.f32.mrb[0].mxu0
    %2340 = vmatprep.mubr.f32.mxu0 0.0
    %v2341 = vand.u32 %v1643, 4294901760
    %v2342 = vsub.f32 %v1643, %v2341
    %v2343 = vand.u32 %v2342, 4294901760
    %2344 = vmatmul.mubr.f32.gmra.mrb[0].mxu0 %v2343
    %v2345 = vpop.f32.mrb[0].mxu0
    %v2346 = vadd.f32 %v2165, %v2345
    %v2347 = vpop.f32.mrb[0].mxu0
    %2348 = vmatprep.mubr.f32.mxu0 0.0
    %v2349 = vand.u32 %v1646, 4294901760
    %v2350 = vsub.f32 %v1646, %v2349
    %v2351 = vand.u32 %v2350, 4294901760
    %2352 = vmatmul.mubr.f32.gmra.mrb[0].mxu0 %v2351
    %v2353 = vpop.f32.mrb[0].mxu0
    %v2354 = vadd.f32 %v2172, %v2353
    %v2355 = vpop.f32.mrb[0].mxu0
    %2356 = vmatprep.mubr.f32.mxu0 0.0
    %v2357 = vand.u32 %v1649, 4294901760
    %v2358 = vsub.f32 %v1649, %v2357
    %v2359 = vand.u32 %v2358, 4294901760
    %2360 = vmatmul.mubr.f32.gmra.mrb[0].mxu0 %v2359
    %v2361 = vpop.f32.mrb[0].mxu0
    %v2362 = vadd.f32 %v2179, %v2361
    %v2363 = vpop.f32.mrb[0].mxu0
    %2364 = vmatprep.mubr.f32.mxu0 0.0
    %v2365 = vand.u32 %v1652, 4294901760
    %v2366 = vsub.f32 %v1652, %v2365
    %v2367 = vand.u32 %v2366, 4294901760
    %2368 = vmatmul.mubr.f32.gmra.mrb[0].mxu0 %v2367
    %v2369 = vpop.f32.mrb[0].mxu0
    %v2370 = vadd.f32 %v2186, %v2369
    %v2371 = vpop.f32.mrb[0].mxu0
    %2372 = vmatprep.mubr.f32.mxu0 0.0
    %v2373 = vand.u32 %v1655, 4294901760
    %v2374 = vsub.f32 %v1655, %v2373
    %v2375 = vand.u32 %v2374, 4294901760
    %2376 = vmatmul.mubr.f32.gmra.mrb[0].mxu0 %v2375
    %v2377 = vpop.f32.mrb[0].mxu0
    %v2378 = vadd.f32 %v2193, %v2377
    %v2379 = vpop.f32.mrb[0].mxu0
    %2380 = vmatprep.mubr.f32.mxu0 0.0
    %v2381 = vand.u32 %v1658, 4294901760
    %v2382 = vsub.f32 %v1658, %v2381
    %v2383 = vand.u32 %v2382, 4294901760
    %2384 = vmatmul.mubr.f32.gmra.mrb[0].mxu0 %v2383
    %v2385 = vpop.f32.mrb[0].mxu0
    %v2386 = vadd.f32 %v2200, %v2385
    %v2387 = vpop.f32.mrb[0].mxu0
    %2388 = vmatprep.mubr.f32.mxu0 0.0
    %v2389 = vand.u32 %v1661, 4294901760
    %v2390 = vsub.f32 %v1661, %v2389
    %v2391 = vand.u32 %v2390, 4294901760
    %2392 = vmatmul.mubr.f32.gmra.mrb[0].mxu0 %v2391
    %v2393 = vpop.f32.mrb[0].mxu0
    %v2394 = vadd.f32 %v2207, %v2393
    %v2395 = vpop.f32.mrb[0].mxu0
    %2396 = vmatprep.mubr.f32.mxu0 0.0
    %v2397 = vand.u32 %v1664, 4294901760
    %v2398 = vsub.f32 %v1664, %v2397
    %v2399 = vand.u32 %v2398, 4294901760
    %2400 = vmatmul.mubr.f32.gmra.mrb[0].mxu0 %v2399
    %v2401 = vpop.f32.mrb[0].mxu0
    %v2402 = vadd.f32 %v2214, %v2401
    %v2403 = vpop.f32.mrb[0].mxu0
    %2404 = vmatprep.mubr.f32.mxu0 0.0
    %v2405 = vand.u32 %v1667, 4294901760
    %v2406 = vsub.f32 %v1667, %v2405
    %v2407 = vand.u32 %v2406, 4294901760
    %2408 = vmatmul.mubr.f32.gmra.mrb[0].mxu0 %v2407
    %v2409 = vpop.f32.mrb[0].mxu0
    %v2410 = vadd.f32 %v2221, %v2409
    %v2411 = vpop.f32.mrb[0].mxu0
    %2412 = vmatprep.mubr.f32.mxu0 0.0
    %v2413 = vand.u32 %v1670, 4294901760
    %v2414 = vsub.f32 %v1670, %v2413
    %v2415 = vand.u32 %v2414, 4294901760
    %2416 = vmatmul.mubr.f32.gmra.mrb[0].mxu0 %v2415
    %v2417 = vpop.f32.mrb[0].mxu0
    %v2418 = vadd.f32 %v2228, %v2417
    %v2419 = vpop.f32.mrb[0].mxu0
    %2420 = vmatprep.mubr.f32.mxu0 0.0
    %v2421 = vand.u32 %v1673, 4294901760
    %v2422 = vsub.f32 %v1673, %v2421
    %v2423 = vand.u32 %v2422, 4294901760
    %2424 = vmatmul.mubr.f32.gmra.mrb[0].mxu0 %v2423
    %v2425 = vpop.f32.mrb[0].mxu0
    %v2426 = vadd.f32 %v2235, %v2425
    %v2427 = vpop.f32.mrb[0].mxu0
    %2428 = vmatprep.mubr.f32.mxu0 0.0
    %v2429 = vand.u32 %v1676, 4294901760
    %v2430 = vsub.f32 %v1676, %v2429
    %v2431 = vand.u32 %v2430, 4294901760
    %2432 = vmatmul.mubr.f32.gmra.mrb[0].mxu0 %v2431
    %v2433 = vpop.f32.mrb[0].mxu0
    %v2434 = vadd.f32 %v2242, %v2433
    %v2435 = vpop.f32.mrb[0].mxu0
    %2436 = vmatprep.mubr.f32.mxu0 0.0
    %v2437 = vand.u32 %v1679, 4294901760
    %v2438 = vsub.f32 %v1679, %v2437
    %v2439 = vand.u32 %v2438, 4294901760
    %2440 = vmatmul.mubr.f32.gmra.mrb[0].mxu0 %v2439
    %v2441 = vpop.f32.mrb[0].mxu0
    %v2442 = vadd.f32 %v2249, %v2441
    %v2443 = vpop.f32.mrb[0].mxu0
    %2444 = vmatprep.mubr.f32.mxu0 0.0
    %v2445 = vand.u32 %v1682, 4294901760
    %v2446 = vsub.f32 %v1682, %v2445
    %v2447 = vand.u32 %v2446, 4294901760
    %2448 = vmatmul.mubr.f32.gmra.mrb[0].mxu0 %v2447
    %v2449 = vpop.f32.mrb[0].mxu0
    %v2450 = vadd.f32 %v2256, %v2449
    %v2451 = vpop.f32.mrb[0].mxu0
    %2452 = vdwg.mxu0
    %2453 = vmatprep.subr.mxu0 0.0
    %v2454 = vand.u32 %v1686, 4294901760
    %v2455 = vsub.f32 %v1686, %v2454
    %v2456 = vand.u32 %v2455, 4294901760
    %2457 = vmatpush1.msra.mxu0 %v2456
    %2458 = vmatprep.subr.mxu0 0.0
    %2459 = vmatpush1.msra.mxu0 0.0
    %2460 = vmatprep.subr.mxu0 0.0
    %2461 = vmatpush1.msra.mxu0 0.0
    %2462 = vmatprep.subr.mxu0 0.0
    %2463 = vmatpush1.msra.mxu0 0.0
    %2464 = vmatprep.subr.mxu0 0.0
    %2465 = vmatpush1.msra.mxu0 0.0
    %2466 = vmatprep.subr.mxu0 0.0
    %2467 = vmatpush1.msra.mxu0 0.0
    %2468 = vmatprep.subr.mxu0 0.0
    %2469 = vmatpush1.msra.mxu0 0.0
    %2470 = vmatprep.subr.mxu0 0.0
    %2471 = vmatpush1.msra.mxu0 0.0
    %2472 = vmatprep.subr.mxu0 0.0
    %2473 = vmatpush1.msra.mxu0 0.0
    %2474 = vmatprep.subr.mxu0 0.0
    %2475 = vmatpush1.msra.mxu0 0.0
    %2476 = vmatprep.subr.mxu0 0.0
    %2477 = vmatpush1.msra.mxu0 0.0
    %2478 = vmatprep.subr.mxu0 0.0
    %2479 = vmatpush1.msra.mxu0 0.0
    %2480 = vmatprep.subr.mxu0 0.0
    %2481 = vmatpush1.msra.mxu0 0.0
    %2482 = vmatprep.subr.mxu0 0.0
    %2483 = vmatpush1.msra.mxu0 0.0
    %2484 = vmatprep.subr.mxu0 0.0
    %2485 = vmatpush1.msra.mxu0 0.0
    %2486 = vmatprep.subr.mxu0 0.0
    %2487 = vmatpush1.msra.mxu0 0.0
    %2488 = vmatprep.subr.mxu0 0.0
    %2489 = vmatpush1.msra.mxu0 0.0
    %2490 = vmatprep.subr.mxu0 0.0
    %2491 = vmatpush1.msra.mxu0 0.0
    %2492 = vmatprep.subr.mxu0 0.0
    %2493 = vmatpush1.msra.mxu0 0.0
    %2494 = vmatprep.subr.mxu0 0.0
    %2495 = vmatpush1.msra.mxu0 0.0
    %2496 = vmatprep.subr.mxu0 0.0
    %2497 = vmatpush1.msra.mxu0 0.0
    %2498 = vmatprep.subr.mxu0 0.0
    %2499 = vmatpush1.msra.mxu0 0.0
    %2500 = vmatprep.subr.mxu0 0.0
    %2501 = vmatpush1.msra.mxu0 0.0
    %2502 = vmatprep.subr.mxu0 0.0
    %2503 = vmatpush1.msra.mxu0 0.0
    %2504 = vmatprep.subr.mxu0 0.0
    %2505 = vmatpush1.msra.mxu0 0.0
    %2506 = vmatprep.subr.mxu0 0.0
    %2507 = vmatpush1.msra.mxu0 0.0
    %2508 = vmatprep.subr.mxu0 0.0
    %2509 = vmatpush1.msra.mxu0 0.0
    %2510 = vmatprep.subr.mxu0 0.0
    %2511 = vmatpush1.msra.mxu0 0.0
    %2512 = vmatprep.subr.mxu0 0.0
    %2513 = vmatpush1.msra.mxu0 0.0
    %2514 = vmatprep.subr.mxu0 0.0
    %2515 = vmatpush1.msra.mxu0 0.0
    %2516 = vmatprep.subr.mxu0 0.0
    %2517 = vmatpush1.msra.mxu0 0.0
    %2518 = vmatprep.subr.mxu0 0.0
    %2519 = vmatpush1.msra.mxu0 0.0
    %2520 = vmatprep.mubr.f32.mxu0 0.0
    %v2521 = vand.u32 %v1637, 4294901760
    %2522 = vmatmul.mubr.f32.gmra.mrb[0].mxu0 %v2521
    %v2523 = vpop.f32.mrb[0].mxu0
    %v2524 = vadd.f32 %v2330, %v2523
    %v2525 = vpop.f32.mrb[0].mxu0
    %2526 = vmatprep.mubr.f32.mxu0 0.0
    %v2527 = vand.u32 %v1640, 4294901760
    %2528 = vmatmul.mubr.f32.gmra.mrb[0].mxu0 %v2527
    %v2529 = vpop.f32.mrb[0].mxu0
    %v2530 = vadd.f32 %v2338, %v2529
    %v2531 = vpop.f32.mrb[0].mxu0
    %2532 = vmatprep.mubr.f32.mxu0 0.0
    %v2533 = vand.u32 %v1643, 4294901760
    %2534 = vmatmul.mubr.f32.gmra.mrb[0].mxu0 %v2533
    %v2535 = vpop.f32.mrb[0].mxu0
    %v2536 = vadd.f32 %v2346, %v2535
    %v2537 = vpop.f32.mrb[0].mxu0
    %2538 = vmatprep.mubr.f32.mxu0 0.0
    %v2539 = vand.u32 %v1646, 4294901760
    %2540 = vmatmul.mubr.f32.gmra.mrb[0].mxu0 %v2539
    %v2541 = vpop.f32.mrb[0].mxu0
    %v2542 = vadd.f32 %v2354, %v2541
    %v2543 = vpop.f32.mrb[0].mxu0
    %2544 = vmatprep.mubr.f32.mxu0 0.0
    %v2545 = vand.u32 %v1649, 4294901760
    %2546 = vmatmul.mubr.f32.gmra.mrb[0].mxu0 %v2545
    %v2547 = vpop.f32.mrb[0].mxu0
    %v2548 = vadd.f32 %v2362, %v2547
    %v2549 = vpop.f32.mrb[0].mxu0
    %2550 = vmatprep.mubr.f32.mxu0 0.0
    %v2551 = vand.u32 %v1652, 4294901760
    %2552 = vmatmul.mubr.f32.gmra.mrb[0].mxu0 %v2551
    %v2553 = vpop.f32.mrb[0].mxu0
    %v2554 = vadd.f32 %v2370, %v2553
    %v2555 = vpop.f32.mrb[0].mxu0
    %2556 = vmatprep.mubr.f32.mxu0 0.0
    %v2557 = vand.u32 %v1655, 4294901760
    %2558 = vmatmul.mubr.f32.gmra.mrb[0].mxu0 %v2557
    %v2559 = vpop.f32.mrb[0].mxu0
    %v2560 = vadd.f32 %v2378, %v2559
    %v2561 = vpop.f32.mrb[0].mxu0
    %2562 = vmatprep.mubr.f32.mxu0 0.0
    %v2563 = vand.u32 %v1658, 4294901760
    %2564 = vmatmul.mubr.f32.gmra.mrb[0].mxu0 %v2563
    %v2565 = vpop.f32.mrb[0].mxu0
    %v2566 = vadd.f32 %v2386, %v2565
    %v2567 = vpop.f32.mrb[0].mxu0
    %2568 = vmatprep.mubr.f32.mxu0 0.0
    %v2569 = vand.u32 %v1661, 4294901760
    %2570 = vmatmul.mubr.f32.gmra.mrb[0].mxu0 %v2569
    %v2571 = vpop.f32.mrb[0].mxu0
    %v2572 = vadd.f32 %v2394, %v2571
    %v2573 = vpop.f32.mrb[0].mxu0
    %2574 = vmatprep.mubr.f32.mxu0 0.0
    %v2575 = vand.u32 %v1664, 4294901760
    %2576 = vmatmul.mubr.f32.gmra.mrb[0].mxu0 %v2575
    %v2577 = vpop.f32.mrb[0].mxu0
    %v2578 = vadd.f32 %v2402, %v2577
    %v2579 = vpop.f32.mrb[0].mxu0
    %2580 = vmatprep.mubr.f32.mxu0 0.0
    %v2581 = vand.u32 %v1667, 4294901760
    %2582 = vmatmul.mubr.f32.gmra.mrb[0].mxu0 %v2581
    %v2583 = vpop.f32.mrb[0].mxu0
    %v2584 = vadd.f32 %v2410, %v2583
    %v2585 = vpop.f32.mrb[0].mxu0
    %2586 = vmatprep.mubr.f32.mxu0 0.0
    %v2587 = vand.u32 %v1670, 4294901760
    %2588 = vmatmul.mubr.f32.gmra.mrb[0].mxu0 %v2587
    %v2589 = vpop.f32.mrb[0].mxu0
    %v2590 = vadd.f32 %v2418, %v2589
    %v2591 = vpop.f32.mrb[0].mxu0
    %2592 = vmatprep.mubr.f32.mxu0 0.0
    %v2593 = vand.u32 %v1673, 4294901760
    %2594 = vmatmul.mubr.f32.gmra.mrb[0].mxu0 %v2593
    %v2595 = vpop.f32.mrb[0].mxu0
    %v2596 = vadd.f32 %v2426, %v2595
    %v2597 = vpop.f32.mrb[0].mxu0
    %2598 = vmatprep.mubr.f32.mxu0 0.0
    %v2599 = vand.u32 %v1676, 4294901760
    %2600 = vmatmul.mubr.f32.gmra.mrb[0].mxu0 %v2599
    %v2601 = vpop.f32.mrb[0].mxu0
    %v2602 = vadd.f32 %v2434, %v2601
    %v2603 = vpop.f32.mrb[0].mxu0
    %2604 = vmatprep.mubr.f32.mxu0 0.0
    %v2605 = vand.u32 %v1679, 4294901760
    %2606 = vmatmul.mubr.f32.gmra.mrb[0].mxu0 %v2605
    %v2607 = vpop.f32.mrb[0].mxu0
    %v2608 = vadd.f32 %v2442, %v2607
    %v2609 = vpop.f32.mrb[0].mxu0
    %2610 = vmatprep.mubr.f32.mxu0 0.0
    %v2611 = vand.u32 %v1682, 4294901760
    %2612 = vmatmul.mubr.f32.gmra.mrb[0].mxu0 %v2611
    %v2613 = vpop.f32.mrb[0].mxu0
    %v2614 = vadd.f32 %v2450, %v2613
    %v2615 = vpop.f32.mrb[0].mxu0
    %2616 = vdwg.mxu0
    %2617 = vmatprep.subr.mxu0 0.0
    %v2618 = vand.u32 %v1686, 4294901760
    %2619 = vmatpush1.msra.mxu0 %v2618
    %2620 = vmatprep.subr.mxu0 0.0
    %2621 = vmatpush1.msra.mxu0 0.0
    %2622 = vmatprep.subr.mxu0 0.0
    %2623 = vmatpush1.msra.mxu0 0.0
    %2624 = vmatprep.subr.mxu0 0.0
    %2625 = vmatpush1.msra.mxu0 0.0
    %2626 = vmatprep.subr.mxu0 0.0
    %2627 = vmatpush1.msra.mxu0 0.0
    %2628 = vmatprep.subr.mxu0 0.0
    %2629 = vmatpush1.msra.mxu0 0.0
    %2630 = vmatprep.subr.mxu0 0.0
    %2631 = vmatpush1.msra.mxu0 0.0
    %2632 = vmatprep.subr.mxu0 0.0
    %2633 = vmatpush1.msra.mxu0 0.0
    %2634 = vmatprep.subr.mxu0 0.0
    %2635 = vmatpush1.msra.mxu0 0.0
    %2636 = vmatprep.subr.mxu0 0.0
    %2637 = vmatpush1.msra.mxu0 0.0
    %2638 = vmatprep.subr.mxu0 0.0
    %2639 = vmatpush1.msra.mxu0 0.0
    %2640 = vmatprep.subr.mxu0 0.0
    %2641 = vmatpush1.msra.mxu0 0.0
    %2642 = vmatprep.subr.mxu0 0.0
    %2643 = vmatpush1.msra.mxu0 0.0
    %2644 = vmatprep.subr.mxu0 0.0
    %2645 = vmatpush1.msra.mxu0 0.0
    %2646 = vmatprep.subr.mxu0 0.0
    %2647 = vmatpush1.msra.mxu0 0.0
    %2648 = vmatprep.subr.mxu0 0.0
    %2649 = vmatpush1.msra.mxu0 0.0
    %2650 = vmatprep.subr.mxu0 0.0
    %2651 = vmatpush1.msra.mxu0 0.0
    %2652 = vmatprep.subr.mxu0 0.0
    %2653 = vmatpush1.msra.mxu0 0.0
    %2654 = vmatprep.subr.mxu0 0.0
    %2655 = vmatpush1.msra.mxu0 0.0
    %2656 = vmatprep.subr.mxu0 0.0
    %2657 = vmatpush1.msra.mxu0 0.0
    %2658 = vmatprep.subr.mxu0 0.0
    %2659 = vmatpush1.msra.mxu0 0.0
    %2660 = vmatprep.subr.mxu0 0.0
    %2661 = vmatpush1.msra.mxu0 0.0
    %2662 = vmatprep.subr.mxu0 0.0
    %2663 = vmatpush1.msra.mxu0 0.0
    %2664 = vmatprep.subr.mxu0 0.0
    %2665 = vmatpush1.msra.mxu0 0.0
    %2666 = vmatprep.subr.mxu0 0.0
    %2667 = vmatpush1.msra.mxu0 0.0
    %2668 = vmatprep.subr.mxu0 0.0
    %2669 = vmatpush1.msra.mxu0 0.0
    %2670 = vmatprep.subr.mxu0 0.0
    %2671 = vmatpush1.msra.mxu0 0.0
    %2672 = vmatprep.subr.mxu0 0.0
    %2673 = vmatpush1.msra.mxu0 0.0
    %2674 = vmatprep.subr.mxu0 0.0
    %2675 = vmatpush1.msra.mxu0 0.0
    %2676 = vmatprep.subr.mxu0 0.0
    %2677 = vmatpush1.msra.mxu0 0.0
    %2678 = vmatprep.subr.mxu0 0.0
    %2679 = vmatpush1.msra.mxu0 0.0
    %2680 = vmatprep.subr.mxu0 0.0
    %2681 = vmatpush1.msra.mxu0 0.0
    %2682 = vmatprep.mubr.f32.mxu0 0.0
    %v2683 = vand.u32 %v1637, 4294901760
    %2684 = vmatmul.mubr.f32.gmra.mrb[0].mxu0 %v2683
    %v2685 = vpop.f32.mrb[0].mxu0
    %v2686 = vadd.f32 %v2524, %v2685
    %v2687 = vpop.f32.mrb[0].mxu0
    %2688 = vmatprep.mubr.f32.mxu0 0.0
    %v2689 = vand.u32 %v1640, 4294901760
    %2690 = vmatmul.mubr.f32.gmra.mrb[0].mxu0 %v2689
    %v2691 = vpop.f32.mrb[0].mxu0
    %v2692 = vadd.f32 %v2530, %v2691
    %v2693 = vpop.f32.mrb[0].mxu0
    %2694 = vmatprep.mubr.f32.mxu0 0.0
    %v2695 = vand.u32 %v1643, 4294901760
    %2696 = vmatmul.mubr.f32.gmra.mrb[0].mxu0 %v2695
    %v2697 = vpop.f32.mrb[0].mxu0
    %v2698 = vadd.f32 %v2536, %v2697
    %v2699 = vpop.f32.mrb[0].mxu0
    %2700 = vmatprep.mubr.f32.mxu0 0.0
    %v2701 = vand.u32 %v1646, 4294901760
    %2702 = vmatmul.mubr.f32.gmra.mrb[0].mxu0 %v2701
    %v2703 = vpop.f32.mrb[0].mxu0
    %v2704 = vadd.f32 %v2542, %v2703
    %v2705 = vpop.f32.mrb[0].mxu0
    %2706 = vmatprep.mubr.f32.mxu0 0.0
    %v2707 = vand.u32 %v1649, 4294901760
    %2708 = vmatmul.mubr.f32.gmra.mrb[0].mxu0 %v2707
    %v2709 = vpop.f32.mrb[0].mxu0
    %v2710 = vadd.f32 %v2548, %v2709
    %v2711 = vpop.f32.mrb[0].mxu0
    %2712 = vmatprep.mubr.f32.mxu0 0.0
    %v2713 = vand.u32 %v1652, 4294901760
    %2714 = vmatmul.mubr.f32.gmra.mrb[0].mxu0 %v2713
    %v2715 = vpop.f32.mrb[0].mxu0
    %v2716 = vadd.f32 %v2554, %v2715
    %v2717 = vpop.f32.mrb[0].mxu0
    %2718 = vmatprep.mubr.f32.mxu0 0.0
    %v2719 = vand.u32 %v1655, 4294901760
    %2720 = vmatmul.mubr.f32.gmra.mrb[0].mxu0 %v2719
    %v2721 = vpop.f32.mrb[0].mxu0
    %v2722 = vadd.f32 %v2560, %v2721
    %v2723 = vpop.f32.mrb[0].mxu0
    %2724 = vmatprep.mubr.f32.mxu0 0.0
    %v2725 = vand.u32 %v1658, 4294901760
    %2726 = vmatmul.mubr.f32.gmra.mrb[0].mxu0 %v2725
    %v2727 = vpop.f32.mrb[0].mxu0
    %v2728 = vadd.f32 %v2566, %v2727
    %v2729 = vpop.f32.mrb[0].mxu0
    %2730 = vmatprep.mubr.f32.mxu0 0.0
    %v2731 = vand.u32 %v1661, 4294901760
    %2732 = vmatmul.mubr.f32.gmra.mrb[0].mxu0 %v2731
    %v2733 = vpop.f32.mrb[0].mxu0
    %v2734 = vadd.f32 %v2572, %v2733
    %v2735 = vpop.f32.mrb[0].mxu0
    %2736 = vmatprep.mubr.f32.mxu0 0.0
    %v2737 = vand.u32 %v1664, 4294901760
    %2738 = vmatmul.mubr.f32.gmra.mrb[0].mxu0 %v2737
    %v2739 = vpop.f32.mrb[0].mxu0
    %v2740 = vadd.f32 %v2578, %v2739
    %v2741 = vpop.f32.mrb[0].mxu0
    %2742 = vmatprep.mubr.f32.mxu0 0.0
    %v2743 = vand.u32 %v1667, 4294901760
    %2744 = vmatmul.mubr.f32.gmra.mrb[0].mxu0 %v2743
    %v2745 = vpop.f32.mrb[0].mxu0
    %v2746 = vadd.f32 %v2584, %v2745
    %v2747 = vpop.f32.mrb[0].mxu0
    %2748 = vmatprep.mubr.f32.mxu0 0.0
    %v2749 = vand.u32 %v1670, 4294901760
    %2750 = vmatmul.mubr.f32.gmra.mrb[0].mxu0 %v2749
    %v2751 = vpop.f32.mrb[0].mxu0
    %v2752 = vadd.f32 %v2590, %v2751
    %v2753 = vpop.f32.mrb[0].mxu0
    %2754 = vmatprep.mubr.f32.mxu0 0.0
    %v2755 = vand.u32 %v1673, 4294901760
    %2756 = vmatmul.mubr.f32.gmra.mrb[0].mxu0 %v2755
    %v2757 = vpop.f32.mrb[0].mxu0
    %v2758 = vadd.f32 %v2596, %v2757
    %v2759 = vpop.f32.mrb[0].mxu0
    %2760 = vmatprep.mubr.f32.mxu0 0.0
    %v2761 = vand.u32 %v1676, 4294901760
    %2762 = vmatmul.mubr.f32.gmra.mrb[0].mxu0 %v2761
    %v2763 = vpop.f32.mrb[0].mxu0
    %v2764 = vadd.f32 %v2602, %v2763
    %v2765 = vpop.f32.mrb[0].mxu0
    %2766 = vmatprep.mubr.f32.mxu0 0.0
    %v2767 = vand.u32 %v1679, 4294901760
    %2768 = vmatmul.mubr.f32.gmra.mrb[0].mxu0 %v2767
    %v2769 = vpop.f32.mrb[0].mxu0
    %v2770 = vadd.f32 %v2608, %v2769
    %v2771 = vpop.f32.mrb[0].mxu0
    %2772 = vmatprep.mubr.f32.mxu0 0.0
    %v2773 = vand.u32 %v1682, 4294901760
    %2774 = vmatmul.mubr.f32.gmra.mrb[0].mxu0 %v2773
    %v2775 = vpop.f32.mrb[0].mxu0
    %v2776 = vadd.f32 %v2614, %v2775
    %v2777 = vpop.f32.mrb[0].mxu0
    %2778 = vdwg.mxu0
    %v2779 = vmul.f32 %v207, %v2686
    %v2780 = vmul.f32 %v208, %v2692
    %v2781 = vmul.f32 %v209, %v2698
    %v2782 = vmul.f32 %v210, %v2704
    %v2783 = vmul.f32 %v211, %v2710
    %v2784 = vmul.f32 %v212, %v2716
    %v2785 = vmul.f32 %v213, %v2722
    %v2786 = vmul.f32 %v214, %v2728
    %v2787 = vmul.f32 %v215, %v2734
    %v2788 = vmul.f32 %v216, %v2740
    %v2789 = vmul.f32 %v217, %v2746
    %v2790 = vmul.f32 %v218, %v2752
    %v2791 = vmul.f32 %v219, %v2758
    %v2792 = vmul.f32 %v220, %v2764
    %v2793 = vmul.f32 %v221, %v2770
    %v2794 = vmul.f32 %v222, %v2776
    %2795 = vst [vmem:[#allocation5] sm:$0xff] %v2779
    %2796 = vst [vmem:[#allocation5 + $0x8] sm:$0xff] %v2780
    %2797 = vst [vmem:[#allocation5 + $0x10] sm:$0xff] %v2781
    %2798 = vst [vmem:[#allocation5 + $0x18] sm:$0xff] %v2782
    %2799 = vst [vmem:[#allocation5 + $0x20] sm:$0xff] %v2783
    %2800 = vst [vmem:[#allocation5 + $0x28] sm:$0xff] %v2784
    %2801 = vst [vmem:[#allocation5 + $0x30] sm:$0xff] %v2785
    %2802 = vst [vmem:[#allocation5 + $0x38] sm:$0xff] %v2786
    %2803 = vst [vmem:[#allocation5 + $0x40] sm:$0xff] %v2787
    %2804 = vst [vmem:[#allocation5 + $0x48] sm:$0xff] %v2788
    %2805 = vst [vmem:[#allocation5 + $0x50] sm:$0xff] %v2789
    %2806 = vst [vmem:[#allocation5 + $0x58] sm:$0xff] %v2790
    %2807 = vst [vmem:[#allocation5 + $0x60] sm:$0xff] %v2791
    %2808 = vst [vmem:[#allocation5 + $0x68] sm:$0xff] %v2792
    %2809 = vst [vmem:[#allocation5 + $0x70] sm:$0xff] %v2793
    %2810 = vst [vmem:[#allocation5 + $0x78] sm:$0xff] %v2794
    // Predicated region
    $region10: #{tpu_custom_call.1} parent=1 // pred_check
      _
    $region11: #{tpu_custom_call.1} parent=1 // pred_check_branch
      %2812 = sbr.rel (0) target = $region13
    $region12: #{tpu_custom_call.1} parent=1 // pred_region
      %s2814 = ssub.s32 2048, 2048
      %2815 = vsyncadd [#allocation4], %s2814
      %s2816 = sshll.u32 [#allocation5], 4
      %s2817 = int_to_ptr.vmem [resolvable:$true] %s2816
      %2822 = dma.vmem_to_hbm [thread:$0]  %s2817, 2048, %s1, [#allocation4], 128, 128, 8
    $region13: #{tpu_custom_call.1} parent=1 // pred_fallthru
      _
    // Predicated region
    $region14: #{tpu_custom_call.1} parent=1 // pred_check
      _
    $region15: #{tpu_custom_call.1} parent=1 // pred_check_branch
      %2824 = sbr.rel (0) target = $region17
    $region16: #{tpu_custom_call.1} parent=1 // pred_region
      %2825 = dma.done [#allocation4], 2048
    $region17: #{tpu_custom_call.1} parent=1 // pred_fallthru
      _
    %2826 = vsyncpa [#allocation3], 1
    %2827 = vsyncpa [#allocation4], 1

</llo_original>
